<compile_context>
chip_gen: v7x
topology: tpu7x:2x2x1
jax: 0.10.0
libtpu: 0.0.40
codegen_flags: <defaults>
</compile_context>

<pallas_src>
import functools

import jax
import jax.numpy as jnp
from jax import lax
from jax.experimental import pallas as pl
from jax.experimental.pallas import tpu as pltpu


def _round_up(x, m):
    return (x + m - 1) // m * m


def _lstm_head_kernel(x_ref, w_ih0_ref, w_ih_rest_ref, w_hh_ref, b_ref,
                      w_out_ref, b_out_ref, out_ref, pre_ref, hseq_ref,
                      *, num_layers, hidden_size, seq_len, batch_pad):
    """Layer-major multi-layer LSTM over time + final Linear head.

    All operands live fully in VMEM at these shapes; the only serialized MXU
    work is the per-timestep h @ w_hh matmul.
    """
    H = hidden_size
    L = num_layers
    S = seq_len
    Bp = batch_pad

    for l in range(L):                          # static unroll over layers
        # ---- batched input->gate projection for the whole sequence -------
        # One (S*Bp, in_dim) @ (in_dim, 4H) matmul; bias folded in here so
        # nothing but the recurrent matmul remains inside the time loop.
        if l == 0:
            inp_seq = x_ref[...]                # (S*Bp, input_size)
            w_ih = w_ih0_ref[...]
        else:
            inp_seq = hseq_ref[...]             # previous layer's h sequence
            w_ih = w_ih_rest_ref[l - 1]
        pre_ref[...] = (jnp.dot(inp_seq, w_ih,
                                preferred_element_type=jnp.float32)
                        + b_ref[l])             # b_ref[l]: (1, 4H) broadcast

        w_hh = w_hh_ref[l]                      # hoisted out of the time loop
        store_h_seq = (l + 1 < L)               # last layer feeds nothing

        def step(t, carry):
            h, c = carry
            row = pl.multiple_of(t * Bp, Bp)    # sublane-aligned block start
            gates = pre_ref[pl.ds(row, Bp), :] + jnp.dot(
                h, w_hh, preferred_element_type=jnp.float32)
            # Two full-vreg EUP passes, then cheap lane slices (i, f, g, o).
            sig = jax.nn.sigmoid(gates)
            tnh = jnp.tanh(gates)
            i_g = sig[:, 0 * H:1 * H]
            f_g = sig[:, 1 * H:2 * H]
            g_g = tnh[:, 2 * H:3 * H]
            o_g = sig[:, 3 * H:4 * H]
            c = f_g * c + i_g * g_g
            h = o_g * jnp.tanh(c)
            if store_h_seq:                     # trace-time branch
                hseq_ref[pl.ds(row, Bp), :] = h
            return (h, c)

        h0 = jnp.zeros((Bp, H), jnp.float32)
        c0 = jnp.zeros((Bp, H), jnp.float32)
        h_last, _ = lax.fori_loop(0, S, step, (h0, c0), unroll=True)

        # ---- Linear head on this layer's final hidden state ---------------
        # Written per-layer directly into a lane-dense (Bp, Mp) row block.
        out_ref[l] = (jnp.dot(h_last, w_out_ref[...],
                              preferred_element_type=jnp.float32)
                      + b_out_ref[...]).astype(out_ref.dtype)


def lstm_head_forward(x, params, *, num_layers, hidden_size):
    B, S, I = x.shape
    H, L = hidden_size, num_layers
    M = params["w_out"].shape[1]

    Bp = _round_up(B, 8)        # f32 sublane tile -> dense activation vregs
    Mp = _round_up(M, 128)      # lane-dense head output block

    # Time-major, batch-padded, flattened: one big input-projection operand.
    xt = jnp.transpose(x, (1, 0, 2))                       # (S, B, I)
    xt = jnp.pad(xt, ((0, 0), (0, Bp - B), (0, 0)))        # (S, Bp, I)
    x2d = xt.reshape(S * Bp, I)

    w_out_p = jnp.pad(params["w_out"], ((0, 0), (0, Mp - M)))
    b_out_p = jnp.pad(params["b_out"], ((0, 0), (0, Mp - M)))

    kernel = functools.partial(_lstm_head_kernel, num_layers=L,
                               hidden_size=H, seq_len=S, batch_pad=Bp)
    vmem = pl.BlockSpec(memory_space=pltpu.MemorySpace.VMEM)
    # TODO(synk): for long sequences / large batches, stream x over a time
    # grid (BlockSpec + h/c carried in VMEM scratch, pl.when init/finalize)
    # and set pltpu.CompilerParams(vmem_limit_bytes=...) so it fits v7x's
    # 64 MiB VMEM; at these toy shapes whole-array VMEM residency is optimal.
    out_p = pl.pallas_call(
        kernel,
        out_shape=jax.ShapeDtypeStruct((L, Bp, Mp), jnp.float32),
        in_specs=[vmem] * 7,
        out_specs=vmem,
        scratch_shapes=[
            pltpu.VMEM((S * Bp, 4 * H), jnp.float32),  # per-layer gate pre-acts
            pltpu.VMEM((S * Bp, H), jnp.float32),      # per-layer h sequence
        ],
    )(x2d, params["w_ih0"], params["w_ih_rest"], params["w_hh"],
      params["b"], w_out_p, b_out_p)

    # hn.view(-1, hidden_size): layer-major row order, then the Linear head.
    return out_p[:, :B, :M].reshape(L * B, M)


def init_params(key, *, input_size, hidden_size, num_layers, num_motions):
    """PyTorch-style uniform(-1/sqrt(H), 1/sqrt(H)) init (transposed layout)."""
    H, L = hidden_size, num_layers
    k = 1.0 / jnp.sqrt(jnp.float32(H))
    keys = jax.random.split(key, 7)

    def u(kk, shape):
        return jax.random.uniform(kk, shape, jnp.float32, -k, k)

    # layer 0 input->gates, layers 1..L-1 input->gates, all hidden->gates.
    w_ih0 = u(keys[0], (input_size, 4 * H))
    w_ih_rest = u(keys[1], (L - 1, H, 4 * H))
    w_hh = u(keys[2], (L, H, 4 * H))
    # PyTorch has separate b_ih and b_hh; their SUM enters the gates
    # (independent keys so the distribution matches b_ih + b_hh).
    b = u(keys[3], (L, 1, 4 * H)) + u(keys[4], (L, 1, 4 * H))
    w_out = u(keys[5], (H, num_motions))
    b_out = u(keys[6], (1, num_motions))
    return dict(w_ih0=w_ih0, w_ih_rest=w_ih_rest, w_hh=w_hh, b=b,
                w_out=w_out, b_out=b_out)


def reference_forward(x, params, *, num_layers, hidden_size):
    """Plain-JAX reference of the same math (for a sanity check)."""
    B, S, _ = x.shape
    H, L = hidden_size, num_layers
    h = [jnp.zeros((B, H), jnp.float32) for _ in range(L)]
    c = [jnp.zeros((B, H), jnp.float32) for _ in range(L)]
    for t in range(S):
        inp = x[:, t, :]
        for l in range(L):
            w_ih = params["w_ih0"] if l == 0 else params["w_ih_rest"][l - 1]
            g = inp @ w_ih + h[l] @ params["w_hh"][l] + params["b"][l]
            i_g = jax.nn.sigmoid(g[:, 0 * H:1 * H])
            f_g = jax.nn.sigmoid(g[:, 1 * H:2 * H])
            g_g = jnp.tanh(g[:, 2 * H:3 * H])
            o_g = jax.nn.sigmoid(g[:, 3 * H:4 * H])
            c[l] = f_g * c[l] + i_g * g_g
            h[l] = o_g * jnp.tanh(c[l])
            inp = h[l]
    hn = jnp.concatenate(h, axis=0)
    return hn @ params["w_out"] + params["b_out"]


if __name__ == "__main__":
    # Small shapes consistent with the module: input_size is fixed at 10.
    batch, seq, input_size = 2, 8, 10
    num_layers, hidden_size, num_motions = 2, 32, 4

    key = jax.random.PRNGKey(0)
    kx, kp = jax.random.split(key)
    x = jax.random.normal(kx, (batch, seq, input_size), jnp.float32)
    params = init_params(kp, input_size=input_size, hidden_size=hidden_size,
                         num_layers=num_layers, num_motions=num_motions)

    out = lstm_head_forward(x, params, num_layers=num_layers,
                            hidden_size=hidden_size)
    out = jax.block_until_ready(out)

    ref = reference_forward(x, params, num_layers=num_layers,
                            hidden_size=hidden_size)
    assert out.shape == (num_layers * batch, num_motions), out.shape
    assert jnp.allclose(out, ref, atol=1e-4, rtol=1e-4), "mismatch vs reference"

    print("KERNEL_OK")
</pallas_src>

<mosaic_0001>
module attributes {stable_mosaic.version = 11 : i64} {
  func.func @_lstm_head_kernel(%arg0: memref<64x10xf32, #tpu.memory_space<vmem>>, %arg1: memref<10x128xf32, #tpu.memory_space<vmem>>, %arg2: memref<1x32x128xf32, #tpu.memory_space<vmem>>, %arg3: memref<2x32x128xf32, #tpu.memory_space<vmem>>, %arg4: memref<2x1x128xf32, #tpu.memory_space<vmem>>, %arg5: memref<32x128xf32, #tpu.memory_space<vmem>>, %arg6: memref<1x128xf32, #tpu.memory_space<vmem>>, %arg7: memref<2x8x128xf32, #tpu.memory_space<vmem>>, %arg8: memref<64x128xf32, #tpu.memory_space<vmem>>, %arg9: memref<64x32xf32, #tpu.memory_space<vmem>>) attributes {dimension_semantics = [], scalar_prefetch = 0 : i64, scratch_operands = 2 : i64, tpu.core_type = #tpu.core_type<tc>} {
    %c0 = arith.constant 0 : index
    %c0_0 = arith.constant 0 : index
    %0 = vector.load %arg0[%c0, %c0_0] : memref<64x10xf32, #tpu.memory_space<vmem>>, vector<64x10xf32>
    %c0_1 = arith.constant 0 : index
    %c0_2 = arith.constant 0 : index
    %1 = vector.load %arg1[%c0_1, %c0_2] : memref<10x128xf32, #tpu.memory_space<vmem>>, vector<10x128xf32>
    %cst = arith.constant dense<0.000000e+00> : vector<64x128xf32>
    %2 = tpu.matmul %0, %1, %cst {dimension_numbers = #tpu.dot_dimension_numbers<[1], [0], [0], [1], [0, 0, 1, 1], [], []>} : vector<64x10xf32>, vector<10x128xf32>, vector<64x128xf32> -> vector<64x128xf32>
    %c0_3 = arith.constant 0 : index
    %c0_4 = arith.constant 0 : index
    %c0_5 = arith.constant 0 : index
    %3 = vector.load %arg4[%c0_3, %c0_4, %c0_5] : memref<2x1x128xf32, #tpu.memory_space<vmem>>, vector<1x1x128xf32>
    %4 = vector.shape_cast %3 : vector<1x1x128xf32> to vector<1x128xf32>
    %5 = vector.broadcast %4 : vector<1x128xf32> to vector<64x128xf32>
    %6 = arith.addf %2, %5 : vector<64x128xf32>
    %c0_6 = arith.constant 0 : index
    %c0_7 = arith.constant 0 : index
    %7 = vector.load %arg8[%c0_6, %c0_7] : memref<64x128xf32, #tpu.memory_space<vmem>>, vector<64x128xf32>
    tpu.vector_store %arg8[%c0_6, %c0_7], %6 {strides = array<i32>} : memref<64x128xf32, #tpu.memory_space<vmem>>, vector<64x128xf32>,
    %c0_8 = arith.constant 0 : index
    %c0_9 = arith.constant 0 : index
    %c0_10 = arith.constant 0 : index
    %8 = vector.load %arg3[%c0_8, %c0_9, %c0_10] : memref<2x32x128xf32, #tpu.memory_space<vmem>>, vector<1x32x128xf32>
    %9 = vector.shape_cast %8 : vector<1x32x128xf32> to vector<32x128xf32>
    %cst_11 = arith.constant 0.000000e+00 : f32
    %10 = vector.broadcast %cst_11 : f32 to vector<8x32xf32>
    %cst_12 = arith.constant 0.000000e+00 : f32
    %11 = vector.broadcast %cst_12 : f32 to vector<8x32xf32>
    %c0_i32 = arith.constant 0 : i32
    %c8_i32 = arith.constant 8 : i32
    %12 = arith.muli %c0_i32, %c8_i32 : i32
    %13 = tpu.assume_multiple %12, 8 : i32
    %14 = arith.index_cast %13 : i32 to index
    %c0_13 = arith.constant 0 : index
    %15 = vector.load %arg8[%14, %c0_13] : memref<64x128xf32, #tpu.memory_space<vmem>>, vector<8x128xf32>
    %cst_14 = arith.constant dense<0.000000e+00> : vector<8x128xf32>
    %16 = tpu.matmul %10, %9, %cst_14 {dimension_numbers = #tpu.dot_dimension_numbers<[1], [0], [0], [1], [0, 0, 1, 1], [], []>} : vector<8x32xf32>, vector<32x128xf32>, vector<8x128xf32> -> vector<8x128xf32>
    %17 = arith.addf %15, %16 : vector<8x128xf32>
    %18 = arith.negf %17 : vector<8x128xf32>
    %19 = math.exp %18 : vector<8x128xf32>
    %cst_15 = arith.constant 1.000000e+00 : f32
    %20 = vector.broadcast %cst_15 : f32 to vector<8x128xf32>
    %21 = arith.addf %20, %19 : vector<8x128xf32>
    %22 = arith.divf %20, %21 : vector<8x128xf32>
    %23 = math.tanh %17 : vector<8x128xf32>
    %24 = vector.extract_strided_slice %22 {offsets = [0, 0], sizes = [8, 32], strides = [1, 1]} : vector<8x128xf32> to vector<8x32xf32>
    %25 = vector.extract_strided_slice %22 {offsets = [0, 32], sizes = [8, 32], strides = [1, 1]} : vector<8x128xf32> to vector<8x32xf32>
    %26 = vector.extract_strided_slice %23 {offsets = [0, 64], sizes = [8, 32], strides = [1, 1]} : vector<8x128xf32> to vector<8x32xf32>
    %27 = vector.extract_strided_slice %22 {offsets = [0, 96], sizes = [8, 32], strides = [1, 1]} : vector<8x128xf32> to vector<8x32xf32>
    %28 = arith.mulf %25, %11 : vector<8x32xf32>
    %29 = arith.mulf %24, %26 : vector<8x32xf32>
    %30 = arith.addf %28, %29 : vector<8x32xf32>
    %31 = math.tanh %30 : vector<8x32xf32>
    %32 = arith.mulf %27, %31 : vector<8x32xf32>
    %33 = arith.index_cast %13 : i32 to index
    %c0_16 = arith.constant 0 : index
    %34 = vector.load %arg9[%33, %c0_16] : memref<64x32xf32, #tpu.memory_space<vmem>>, vector<8x32xf32>
    tpu.vector_store %arg9[%33, %c0_16], %32 {strides = array<i32>} : memref<64x32xf32, #tpu.memory_space<vmem>>, vector<8x32xf32>,
    %c1_i32 = arith.constant 1 : i32
    %c8_i32_17 = arith.constant 8 : i32
    %35 = arith.muli %c1_i32, %c8_i32_17 : i32
    %36 = tpu.assume_multiple %35, 8 : i32
    %37 = arith.index_cast %36 : i32 to index
    %c0_18 = arith.constant 0 : index
    %38 = vector.load %arg8[%37, %c0_18] : memref<64x128xf32, #tpu.memory_space<vmem>>, vector<8x128xf32>
    %cst_19 = arith.constant dense<0.000000e+00> : vector<8x128xf32>
    %39 = tpu.matmul %32, %9, %cst_19 {dimension_numbers = #tpu.dot_dimension_numbers<[1], [0], [0], [1], [0, 0, 1, 1], [], []>} : vector<8x32xf32>, vector<32x128xf32>, vector<8x128xf32> -> vector<8x128xf32>
    %40 = arith.addf %38, %39 : vector<8x128xf32>
    %41 = arith.negf %40 : vector<8x128xf32>
    %42 = math.exp %41 : vector<8x128xf32>
    %cst_20 = arith.constant 1.000000e+00 : f32
    %43 = vector.broadcast %cst_20 : f32 to vector<8x128xf32>
    %44 = arith.addf %43, %42 : vector<8x128xf32>
    %45 = arith.divf %43, %44 : vector<8x128xf32>
    %46 = math.tanh %40 : vector<8x128xf32>
    %47 = vector.extract_strided_slice %45 {offsets = [0, 0], sizes = [8, 32], strides = [1, 1]} : vector<8x128xf32> to vector<8x32xf32>
    %48 = vector.extract_strided_slice %45 {offsets = [0, 32], sizes = [8, 32], strides = [1, 1]} : vector<8x128xf32> to vector<8x32xf32>
    %49 = vector.extract_strided_slice %46 {offsets = [0, 64], sizes = [8, 32], strides = [1, 1]} : vector<8x128xf32> to vector<8x32xf32>
    %50 = vector.extract_strided_slice %45 {offsets = [0, 96], sizes = [8, 32], strides = [1, 1]} : vector<8x128xf32> to vector<8x32xf32>
    %51 = arith.mulf %48, %30 : vector<8x32xf32>
    %52 = arith.mulf %47, %49 : vector<8x32xf32>
    %53 = arith.addf %51, %52 : vector<8x32xf32>
    %54 = math.tanh %53 : vector<8x32xf32>
    %55 = arith.mulf %50, %54 : vector<8x32xf32>
    %56 = arith.index_cast %36 : i32 to index
    %c0_21 = arith.constant 0 : index
    %57 = vector.load %arg9[%56, %c0_21] : memref<64x32xf32, #tpu.memory_space<vmem>>, vector<8x32xf32>
    tpu.vector_store %arg9[%56, %c0_21], %55 {strides = array<i32>} : memref<64x32xf32, #tpu.memory_space<vmem>>, vector<8x32xf32>,
    %c2_i32 = arith.constant 2 : i32
    %c8_i32_22 = arith.constant 8 : i32
    %58 = arith.muli %c2_i32, %c8_i32_22 : i32
    %59 = tpu.assume_multiple %58, 8 : i32
    %60 = arith.index_cast %59 : i32 to index
    %c0_23 = arith.constant 0 : index
    %61 = vector.load %arg8[%60, %c0_23] : memref<64x128xf32, #tpu.memory_space<vmem>>, vector<8x128xf32>
    %cst_24 = arith.constant dense<0.000000e+00> : vector<8x128xf32>
    %62 = tpu.matmul %55, %9, %cst_24 {dimension_numbers = #tpu.dot_dimension_numbers<[1], [0], [0], [1], [0, 0, 1, 1], [], []>} : vector<8x32xf32>, vector<32x128xf32>, vector<8x128xf32> -> vector<8x128xf32>
    %63 = arith.addf %61, %62 : vector<8x128xf32>
    %64 = arith.negf %63 : vector<8x128xf32>
    %65 = math.exp %64 : vector<8x128xf32>
    %cst_25 = arith.constant 1.000000e+00 : f32
    %66 = vector.broadcast %cst_25 : f32 to vector<8x128xf32>
    %67 = arith.addf %66, %65 : vector<8x128xf32>
    %68 = arith.divf %66, %67 : vector<8x128xf32>
    %69 = math.tanh %63 : vector<8x128xf32>
    %70 = vector.extract_strided_slice %68 {offsets = [0, 0], sizes = [8, 32], strides = [1, 1]} : vector<8x128xf32> to vector<8x32xf32>
    %71 = vector.extract_strided_slice %68 {offsets = [0, 32], sizes = [8, 32], strides = [1, 1]} : vector<8x128xf32> to vector<8x32xf32>
    %72 = vector.extract_strided_slice %69 {offsets = [0, 64], sizes = [8, 32], strides = [1, 1]} : vector<8x128xf32> to vector<8x32xf32>
    %73 = vector.extract_strided_slice %68 {offsets = [0, 96], sizes = [8, 32], strides = [1, 1]} : vector<8x128xf32> to vector<8x32xf32>
    %74 = arith.mulf %71, %53 : vector<8x32xf32>
    %75 = arith.mulf %70, %72 : vector<8x32xf32>
    %76 = arith.addf %74, %75 : vector<8x32xf32>
    %77 = math.tanh %76 : vector<8x32xf32>
    %78 = arith.mulf %73, %77 : vector<8x32xf32>
    %79 = arith.index_cast %59 : i32 to index
    %c0_26 = arith.constant 0 : index
    %80 = vector.load %arg9[%79, %c0_26] : memref<64x32xf32, #tpu.memory_space<vmem>>, vector<8x32xf32>
    tpu.vector_store %arg9[%79, %c0_26], %78 {strides = array<i32>} : memref<64x32xf32, #tpu.memory_space<vmem>>, vector<8x32xf32>,
    %c3_i32 = arith.constant 3 : i32
    %c8_i32_27 = arith.constant 8 : i32
    %81 = arith.muli %c3_i32, %c8_i32_27 : i32
    %82 = tpu.assume_multiple %81, 8 : i32
    %83 = arith.index_cast %82 : i32 to index
    %c0_28 = arith.constant 0 : index
    %84 = vector.load %arg8[%83, %c0_28] : memref<64x128xf32, #tpu.memory_space<vmem>>, vector<8x128xf32>
    %cst_29 = arith.constant dense<0.000000e+00> : vector<8x128xf32>
    %85 = tpu.matmul %78, %9, %cst_29 {dimension_numbers = #tpu.dot_dimension_numbers<[1], [0], [0], [1], [0, 0, 1, 1], [], []>} : vector<8x32xf32>, vector<32x128xf32>, vector<8x128xf32> -> vector<8x128xf32>
    %86 = arith.addf %84, %85 : vector<8x128xf32>
    %87 = arith.negf %86 : vector<8x128xf32>
    %88 = math.exp %87 : vector<8x128xf32>
    %cst_30 = arith.constant 1.000000e+00 : f32
    %89 = vector.broadcast %cst_30 : f32 to vector<8x128xf32>
    %90 = arith.addf %89, %88 : vector<8x128xf32>
    %91 = arith.divf %89, %90 : vector<8x128xf32>
    %92 = math.tanh %86 : vector<8x128xf32>
    %93 = vector.extract_strided_slice %91 {offsets = [0, 0], sizes = [8, 32], strides = [1, 1]} : vector<8x128xf32> to vector<8x32xf32>
    %94 = vector.extract_strided_slice %91 {offsets = [0, 32], sizes = [8, 32], strides = [1, 1]} : vector<8x128xf32> to vector<8x32xf32>
    %95 = vector.extract_strided_slice %92 {offsets = [0, 64], sizes = [8, 32], strides = [1, 1]} : vector<8x128xf32> to vector<8x32xf32>
    %96 = vector.extract_strided_slice %91 {offsets = [0, 96], sizes = [8, 32], strides = [1, 1]} : vector<8x128xf32> to vector<8x32xf32>
    %97 = arith.mulf %94, %76 : vector<8x32xf32>
    %98 = arith.mulf %93, %95 : vector<8x32xf32>
    %99 = arith.addf %97, %98 : vector<8x32xf32>
    %100 = math.tanh %99 : vector<8x32xf32>
    %101 = arith.mulf %96, %100 : vector<8x32xf32>
    %102 = arith.index_cast %82 : i32 to index
    %c0_31 = arith.constant 0 : index
    %103 = vector.load %arg9[%102, %c0_31] : memref<64x32xf32, #tpu.memory_space<vmem>>, vector<8x32xf32>
    tpu.vector_store %arg9[%102, %c0_31], %101 {strides = array<i32>} : memref<64x32xf32, #tpu.memory_space<vmem>>, vector<8x32xf32>,
    %c4_i32 = arith.constant 4 : i32
    %c8_i32_32 = arith.constant 8 : i32
    %104 = arith.muli %c4_i32, %c8_i32_32 : i32
    %105 = tpu.assume_multiple %104, 8 : i32
    %106 = arith.index_cast %105 : i32 to index
    %c0_33 = arith.constant 0 : index
    %107 = vector.load %arg8[%106, %c0_33] : memref<64x128xf32, #tpu.memory_space<vmem>>, vector<8x128xf32>
    %cst_34 = arith.constant dense<0.000000e+00> : vector<8x128xf32>
    %108 = tpu.matmul %101, %9, %cst_34 {dimension_numbers = #tpu.dot_dimension_numbers<[1], [0], [0], [1], [0, 0, 1, 1], [], []>} : vector<8x32xf32>, vector<32x128xf32>, vector<8x128xf32> -> vector<8x128xf32>
    %109 = arith.addf %107, %108 : vector<8x128xf32>
    %110 = arith.negf %109 : vector<8x128xf32>
    %111 = math.exp %110 : vector<8x128xf32>
    %cst_35 = arith.constant 1.000000e+00 : f32
    %112 = vector.broadcast %cst_35 : f32 to vector<8x128xf32>
    %113 = arith.addf %112, %111 : vector<8x128xf32>
    %114 = arith.divf %112, %113 : vector<8x128xf32>
    %115 = math.tanh %109 : vector<8x128xf32>
    %116 = vector.extract_strided_slice %114 {offsets = [0, 0], sizes = [8, 32], strides = [1, 1]} : vector<8x128xf32> to vector<8x32xf32>
    %117 = vector.extract_strided_slice %114 {offsets = [0, 32], sizes = [8, 32], strides = [1, 1]} : vector<8x128xf32> to vector<8x32xf32>
    %118 = vector.extract_strided_slice %115 {offsets = [0, 64], sizes = [8, 32], strides = [1, 1]} : vector<8x128xf32> to vector<8x32xf32>
    %119 = vector.extract_strided_slice %114 {offsets = [0, 96], sizes = [8, 32], strides = [1, 1]} : vector<8x128xf32> to vector<8x32xf32>
    %120 = arith.mulf %117, %99 : vector<8x32xf32>
    %121 = arith.mulf %116, %118 : vector<8x32xf32>
    %122 = arith.addf %120, %121 : vector<8x32xf32>
    %123 = math.tanh %122 : vector<8x32xf32>
    %124 = arith.mulf %119, %123 : vector<8x32xf32>
    %125 = arith.index_cast %105 : i32 to index
    %c0_36 = arith.constant 0 : index
    %126 = vector.load %arg9[%125, %c0_36] : memref<64x32xf32, #tpu.memory_space<vmem>>, vector<8x32xf32>
    tpu.vector_store %arg9[%125, %c0_36], %124 {strides = array<i32>} : memref<64x32xf32, #tpu.memory_space<vmem>>, vector<8x32xf32>,
    %c5_i32 = arith.constant 5 : i32
    %c8_i32_37 = arith.constant 8 : i32
    %127 = arith.muli %c5_i32, %c8_i32_37 : i32
    %128 = tpu.assume_multiple %127, 8 : i32
    %129 = arith.index_cast %128 : i32 to index
    %c0_38 = arith.constant 0 : index
    %130 = vector.load %arg8[%129, %c0_38] : memref<64x128xf32, #tpu.memory_space<vmem>>, vector<8x128xf32>
    %cst_39 = arith.constant dense<0.000000e+00> : vector<8x128xf32>
    %131 = tpu.matmul %124, %9, %cst_39 {dimension_numbers = #tpu.dot_dimension_numbers<[1], [0], [0], [1], [0, 0, 1, 1], [], []>} : vector<8x32xf32>, vector<32x128xf32>, vector<8x128xf32> -> vector<8x128xf32>
    %132 = arith.addf %130, %131 : vector<8x128xf32>
    %133 = arith.negf %132 : vector<8x128xf32>
    %134 = math.exp %133 : vector<8x128xf32>
    %cst_40 = arith.constant 1.000000e+00 : f32
    %135 = vector.broadcast %cst_40 : f32 to vector<8x128xf32>
    %136 = arith.addf %135, %134 : vector<8x128xf32>
    %137 = arith.divf %135, %136 : vector<8x128xf32>
    %138 = math.tanh %132 : vector<8x128xf32>
    %139 = vector.extract_strided_slice %137 {offsets = [0, 0], sizes = [8, 32], strides = [1, 1]} : vector<8x128xf32> to vector<8x32xf32>
    %140 = vector.extract_strided_slice %137 {offsets = [0, 32], sizes = [8, 32], strides = [1, 1]} : vector<8x128xf32> to vector<8x32xf32>
    %141 = vector.extract_strided_slice %138 {offsets = [0, 64], sizes = [8, 32], strides = [1, 1]} : vector<8x128xf32> to vector<8x32xf32>
    %142 = vector.extract_strided_slice %137 {offsets = [0, 96], sizes = [8, 32], strides = [1, 1]} : vector<8x128xf32> to vector<8x32xf32>
    %143 = arith.mulf %140, %122 : vector<8x32xf32>
    %144 = arith.mulf %139, %141 : vector<8x32xf32>
    %145 = arith.addf %143, %144 : vector<8x32xf32>
    %146 = math.tanh %145 : vector<8x32xf32>
    %147 = arith.mulf %142, %146 : vector<8x32xf32>
    %148 = arith.index_cast %128 : i32 to index
    %c0_41 = arith.constant 0 : index
    %149 = vector.load %arg9[%148, %c0_41] : memref<64x32xf32, #tpu.memory_space<vmem>>, vector<8x32xf32>
    tpu.vector_store %arg9[%148, %c0_41], %147 {strides = array<i32>} : memref<64x32xf32, #tpu.memory_space<vmem>>, vector<8x32xf32>,
    %c6_i32 = arith.constant 6 : i32
    %c8_i32_42 = arith.constant 8 : i32
    %150 = arith.muli %c6_i32, %c8_i32_42 : i32
    %151 = tpu.assume_multiple %150, 8 : i32
    %152 = arith.index_cast %151 : i32 to index
    %c0_43 = arith.constant 0 : index
    %153 = vector.load %arg8[%152, %c0_43] : memref<64x128xf32, #tpu.memory_space<vmem>>, vector<8x128xf32>
    %cst_44 = arith.constant dense<0.000000e+00> : vector<8x128xf32>
    %154 = tpu.matmul %147, %9, %cst_44 {dimension_numbers = #tpu.dot_dimension_numbers<[1], [0], [0], [1], [0, 0, 1, 1], [], []>} : vector<8x32xf32>, vector<32x128xf32>, vector<8x128xf32> -> vector<8x128xf32>
    %155 = arith.addf %153, %154 : vector<8x128xf32>
    %156 = arith.negf %155 : vector<8x128xf32>
    %157 = math.exp %156 : vector<8x128xf32>
    %cst_45 = arith.constant 1.000000e+00 : f32
    %158 = vector.broadcast %cst_45 : f32 to vector<8x128xf32>
    %159 = arith.addf %158, %157 : vector<8x128xf32>
    %160 = arith.divf %158, %159 : vector<8x128xf32>
    %161 = math.tanh %155 : vector<8x128xf32>
    %162 = vector.extract_strided_slice %160 {offsets = [0, 0], sizes = [8, 32], strides = [1, 1]} : vector<8x128xf32> to vector<8x32xf32>
    %163 = vector.extract_strided_slice %160 {offsets = [0, 32], sizes = [8, 32], strides = [1, 1]} : vector<8x128xf32> to vector<8x32xf32>
    %164 = vector.extract_strided_slice %161 {offsets = [0, 64], sizes = [8, 32], strides = [1, 1]} : vector<8x128xf32> to vector<8x32xf32>
    %165 = vector.extract_strided_slice %160 {offsets = [0, 96], sizes = [8, 32], strides = [1, 1]} : vector<8x128xf32> to vector<8x32xf32>
    %166 = arith.mulf %163, %145 : vector<8x32xf32>
    %167 = arith.mulf %162, %164 : vector<8x32xf32>
    %168 = arith.addf %166, %167 : vector<8x32xf32>
    %169 = math.tanh %168 : vector<8x32xf32>
    %170 = arith.mulf %165, %169 : vector<8x32xf32>
    %171 = arith.index_cast %151 : i32 to index
    %c0_46 = arith.constant 0 : index
    %172 = vector.load %arg9[%171, %c0_46] : memref<64x32xf32, #tpu.memory_space<vmem>>, vector<8x32xf32>
    tpu.vector_store %arg9[%171, %c0_46], %170 {strides = array<i32>} : memref<64x32xf32, #tpu.memory_space<vmem>>, vector<8x32xf32>,
    %c7_i32 = arith.constant 7 : i32
    %c8_i32_47 = arith.constant 8 : i32
    %173 = arith.muli %c7_i32, %c8_i32_47 : i32
    %174 = tpu.assume_multiple %173, 8 : i32
    %175 = arith.index_cast %174 : i32 to index
    %c0_48 = arith.constant 0 : index
    %176 = vector.load %arg8[%175, %c0_48] : memref<64x128xf32, #tpu.memory_space<vmem>>, vector<8x128xf32>
    %cst_49 = arith.constant dense<0.000000e+00> : vector<8x128xf32>
    %177 = tpu.matmul %170, %9, %cst_49 {dimension_numbers = #tpu.dot_dimension_numbers<[1], [0], [0], [1], [0, 0, 1, 1], [], []>} : vector<8x32xf32>, vector<32x128xf32>, vector<8x128xf32> -> vector<8x128xf32>
    %178 = arith.addf %176, %177 : vector<8x128xf32>
    %179 = arith.negf %178 : vector<8x128xf32>
    %180 = math.exp %179 : vector<8x128xf32>
    %cst_50 = arith.constant 1.000000e+00 : f32
    %181 = vector.broadcast %cst_50 : f32 to vector<8x128xf32>
    %182 = arith.addf %181, %180 : vector<8x128xf32>
    %183 = arith.divf %181, %182 : vector<8x128xf32>
    %184 = math.tanh %178 : vector<8x128xf32>
    %185 = vector.extract_strided_slice %183 {offsets = [0, 0], sizes = [8, 32], strides = [1, 1]} : vector<8x128xf32> to vector<8x32xf32>
    %186 = vector.extract_strided_slice %183 {offsets = [0, 32], sizes = [8, 32], strides = [1, 1]} : vector<8x128xf32> to vector<8x32xf32>
    %187 = vector.extract_strided_slice %184 {offsets = [0, 64], sizes = [8, 32], strides = [1, 1]} : vector<8x128xf32> to vector<8x32xf32>
    %188 = vector.extract_strided_slice %183 {offsets = [0, 96], sizes = [8, 32], strides = [1, 1]} : vector<8x128xf32> to vector<8x32xf32>
    %189 = arith.mulf %186, %168 : vector<8x32xf32>
    %190 = arith.mulf %185, %187 : vector<8x32xf32>
    %191 = arith.addf %189, %190 : vector<8x32xf32>
    %192 = math.tanh %191 : vector<8x32xf32>
    %193 = arith.mulf %188, %192 : vector<8x32xf32>
    %194 = arith.index_cast %174 : i32 to index
    %c0_51 = arith.constant 0 : index
    %195 = vector.load %arg9[%194, %c0_51] : memref<64x32xf32, #tpu.memory_space<vmem>>, vector<8x32xf32>
    tpu.vector_store %arg9[%194, %c0_51], %193 {strides = array<i32>} : memref<64x32xf32, #tpu.memory_space<vmem>>, vector<8x32xf32>,
    %c8_i32_52 = arith.constant 8 : i32
    %c0_53 = arith.constant 0 : index
    %c0_54 = arith.constant 0 : index
    %196 = vector.load %arg5[%c0_53, %c0_54] : memref<32x128xf32, #tpu.memory_space<vmem>>, vector<32x128xf32>
    %cst_55 = arith.constant dense<0.000000e+00> : vector<8x128xf32>
    %197 = tpu.matmul %193, %196, %cst_55 {dimension_numbers = #tpu.dot_dimension_numbers<[1], [0], [0], [1], [0, 0, 1, 1], [], []>} : vector<8x32xf32>, vector<32x128xf32>, vector<8x128xf32> -> vector<8x128xf32>
    %c0_56 = arith.constant 0 : index
    %c0_57 = arith.constant 0 : index
    %198 = vector.load %arg6[%c0_56, %c0_57] : memref<1x128xf32, #tpu.memory_space<vmem>>, vector<1x128xf32>
    %199 = vector.broadcast %198 : vector<1x128xf32> to vector<8x128xf32>
    %200 = arith.addf %197, %199 : vector<8x128xf32>
    %c0_58 = arith.constant 0 : index
    %c0_59 = arith.constant 0 : index
    %c0_60 = arith.constant 0 : index
    %201 = vector.load %arg7[%c0_58, %c0_59, %c0_60] : memref<2x8x128xf32, #tpu.memory_space<vmem>>, vector<1x8x128xf32>
    %202 = vector.shape_cast %201 : vector<1x8x128xf32> to vector<8x128xf32>
    %203 = vector.shape_cast %200 : vector<8x128xf32> to vector<1x8x128xf32>
    tpu.vector_store %arg7[%c0_58, %c0_59, %c0_60], %203 {strides = array<i32>} : memref<2x8x128xf32, #tpu.memory_space<vmem>>, vector<1x8x128xf32>,
    %c0_61 = arith.constant 0 : index
    %c0_62 = arith.constant 0 : index
    %204 = vector.load %arg9[%c0_61, %c0_62] : memref<64x32xf32, #tpu.memory_space<vmem>>, vector<64x32xf32>
    %c0_63 = arith.constant 0 : index
    %c0_64 = arith.constant 0 : index
    %c0_65 = arith.constant 0 : index
    %205 = vector.load %arg2[%c0_63, %c0_64, %c0_65] : memref<1x32x128xf32, #tpu.memory_space<vmem>>, vector<1x32x128xf32>
    %206 = vector.shape_cast %205 : vector<1x32x128xf32> to vector<32x128xf32>
    %cst_66 = arith.constant dense<0.000000e+00> : vector<64x128xf32>
    %207 = tpu.matmul %204, %206, %cst_66 {dimension_numbers = #tpu.dot_dimension_numbers<[1], [0], [0], [1], [0, 0, 1, 1], [], []>} : vector<64x32xf32>, vector<32x128xf32>, vector<64x128xf32> -> vector<64x128xf32>
    %c1 = arith.constant 1 : index
    %c0_67 = arith.constant 0 : index
    %c0_68 = arith.constant 0 : index
    %208 = vector.load %arg4[%c1, %c0_67, %c0_68] : memref<2x1x128xf32, #tpu.memory_space<vmem>>, vector<1x1x128xf32>
    %209 = vector.shape_cast %208 : vector<1x1x128xf32> to vector<1x128xf32>
    %210 = vector.broadcast %209 : vector<1x128xf32> to vector<64x128xf32>
    %211 = arith.addf %207, %210 : vector<64x128xf32>
    %c0_69 = arith.constant 0 : index
    %c0_70 = arith.constant 0 : index
    %212 = vector.load %arg8[%c0_69, %c0_70] : memref<64x128xf32, #tpu.memory_space<vmem>>, vector<64x128xf32>
    tpu.vector_store %arg8[%c0_69, %c0_70], %211 {strides = array<i32>} : memref<64x128xf32, #tpu.memory_space<vmem>>, vector<64x128xf32>,
    %c1_71 = arith.constant 1 : index
    %c0_72 = arith.constant 0 : index
    %c0_73 = arith.constant 0 : index
    %213 = vector.load %arg3[%c1_71, %c0_72, %c0_73] : memref<2x32x128xf32, #tpu.memory_space<vmem>>, vector<1x32x128xf32>
    %214 = vector.shape_cast %213 : vector<1x32x128xf32> to vector<32x128xf32>
    %cst_74 = arith.constant 0.000000e+00 : f32
    %215 = vector.broadcast %cst_74 : f32 to vector<8x32xf32>
    %cst_75 = arith.constant 0.000000e+00 : f32
    %216 = vector.broadcast %cst_75 : f32 to vector<8x32xf32>
    %c0_i32_76 = arith.constant 0 : i32
    %c8_i32_77 = arith.constant 8 : i32
    %217 = arith.muli %c0_i32_76, %c8_i32_77 : i32
    %218 = tpu.assume_multiple %217, 8 : i32
    %219 = arith.index_cast %218 : i32 to index
    %c0_78 = arith.constant 0 : index
    %220 = vector.load %arg8[%219, %c0_78] : memref<64x128xf32, #tpu.memory_space<vmem>>, vector<8x128xf32>
    %cst_79 = arith.constant dense<0.000000e+00> : vector<8x128xf32>
    %221 = tpu.matmul %215, %214, %cst_79 {dimension_numbers = #tpu.dot_dimension_numbers<[1], [0], [0], [1], [0, 0, 1, 1], [], []>} : vector<8x32xf32>, vector<32x128xf32>, vector<8x128xf32> -> vector<8x128xf32>
    %222 = arith.addf %220, %221 : vector<8x128xf32>
    %223 = arith.negf %222 : vector<8x128xf32>
    %224 = math.exp %223 : vector<8x128xf32>
    %cst_80 = arith.constant 1.000000e+00 : f32
    %225 = vector.broadcast %cst_80 : f32 to vector<8x128xf32>
    %226 = arith.addf %225, %224 : vector<8x128xf32>
    %227 = arith.divf %225, %226 : vector<8x128xf32>
    %228 = math.tanh %222 : vector<8x128xf32>
    %229 = vector.extract_strided_slice %227 {offsets = [0, 0], sizes = [8, 32], strides = [1, 1]} : vector<8x128xf32> to vector<8x32xf32>
    %230 = vector.extract_strided_slice %227 {offsets = [0, 32], sizes = [8, 32], strides = [1, 1]} : vector<8x128xf32> to vector<8x32xf32>
    %231 = vector.extract_strided_slice %228 {offsets = [0, 64], sizes = [8, 32], strides = [1, 1]} : vector<8x128xf32> to vector<8x32xf32>
    %232 = vector.extract_strided_slice %227 {offsets = [0, 96], sizes = [8, 32], strides = [1, 1]} : vector<8x128xf32> to vector<8x32xf32>
    %233 = arith.mulf %230, %216 : vector<8x32xf32>
    %234 = arith.mulf %229, %231 : vector<8x32xf32>
    %235 = arith.addf %233, %234 : vector<8x32xf32>
    %236 = math.tanh %235 : vector<8x32xf32>
    %237 = arith.mulf %232, %236 : vector<8x32xf32>
    %c1_i32_81 = arith.constant 1 : i32
    %c8_i32_82 = arith.constant 8 : i32
    %238 = arith.muli %c1_i32_81, %c8_i32_82 : i32
    %239 = tpu.assume_multiple %238, 8 : i32
    %240 = arith.index_cast %239 : i32 to index
    %c0_83 = arith.constant 0 : index
    %241 = vector.load %arg8[%240, %c0_83] : memref<64x128xf32, #tpu.memory_space<vmem>>, vector<8x128xf32>
    %cst_84 = arith.constant dense<0.000000e+00> : vector<8x128xf32>
    %242 = tpu.matmul %237, %214, %cst_84 {dimension_numbers = #tpu.dot_dimension_numbers<[1], [0], [0], [1], [0, 0, 1, 1], [], []>} : vector<8x32xf32>, vector<32x128xf32>, vector<8x128xf32> -> vector<8x128xf32>
    %243 = arith.addf %241, %242 : vector<8x128xf32>
    %244 = arith.negf %243 : vector<8x128xf32>
    %245 = math.exp %244 : vector<8x128xf32>
    %cst_85 = arith.constant 1.000000e+00 : f32
    %246 = vector.broadcast %cst_85 : f32 to vector<8x128xf32>
    %247 = arith.addf %246, %245 : vector<8x128xf32>
    %248 = arith.divf %246, %247 : vector<8x128xf32>
    %249 = math.tanh %243 : vector<8x128xf32>
    %250 = vector.extract_strided_slice %248 {offsets = [0, 0], sizes = [8, 32], strides = [1, 1]} : vector<8x128xf32> to vector<8x32xf32>
    %251 = vector.extract_strided_slice %248 {offsets = [0, 32], sizes = [8, 32], strides = [1, 1]} : vector<8x128xf32> to vector<8x32xf32>
    %252 = vector.extract_strided_slice %249 {offsets = [0, 64], sizes = [8, 32], strides = [1, 1]} : vector<8x128xf32> to vector<8x32xf32>
    %253 = vector.extract_strided_slice %248 {offsets = [0, 96], sizes = [8, 32], strides = [1, 1]} : vector<8x128xf32> to vector<8x32xf32>
    %254 = arith.mulf %251, %235 : vector<8x32xf32>
    %255 = arith.mulf %250, %252 : vector<8x32xf32>
    %256 = arith.addf %254, %255 : vector<8x32xf32>
    %257 = math.tanh %256 : vector<8x32xf32>
    %258 = arith.mulf %253, %257 : vector<8x32xf32>
    %c2_i32_86 = arith.constant 2 : i32
    %c8_i32_87 = arith.constant 8 : i32
    %259 = arith.muli %c2_i32_86, %c8_i32_87 : i32
    %260 = tpu.assume_multiple %259, 8 : i32
    %261 = arith.index_cast %260 : i32 to index
    %c0_88 = arith.constant 0 : index
    %262 = vector.load %arg8[%261, %c0_88] : memref<64x128xf32, #tpu.memory_space<vmem>>, vector<8x128xf32>
    %cst_89 = arith.constant dense<0.000000e+00> : vector<8x128xf32>
    %263 = tpu.matmul %258, %214, %cst_89 {dimension_numbers = #tpu.dot_dimension_numbers<[1], [0], [0], [1], [0, 0, 1, 1], [], []>} : vector<8x32xf32>, vector<32x128xf32>, vector<8x128xf32> -> vector<8x128xf32>
    %264 = arith.addf %262, %263 : vector<8x128xf32>
    %265 = arith.negf %264 : vector<8x128xf32>
    %266 = math.exp %265 : vector<8x128xf32>
    %cst_90 = arith.constant 1.000000e+00 : f32
    %267 = vector.broadcast %cst_90 : f32 to vector<8x128xf32>
    %268 = arith.addf %267, %266 : vector<8x128xf32>
    %269 = arith.divf %267, %268 : vector<8x128xf32>
    %270 = math.tanh %264 : vector<8x128xf32>
    %271 = vector.extract_strided_slice %269 {offsets = [0, 0], sizes = [8, 32], strides = [1, 1]} : vector<8x128xf32> to vector<8x32xf32>
    %272 = vector.extract_strided_slice %269 {offsets = [0, 32], sizes = [8, 32], strides = [1, 1]} : vector<8x128xf32> to vector<8x32xf32>
    %273 = vector.extract_strided_slice %270 {offsets = [0, 64], sizes = [8, 32], strides = [1, 1]} : vector<8x128xf32> to vector<8x32xf32>
    %274 = vector.extract_strided_slice %269 {offsets = [0, 96], sizes = [8, 32], strides = [1, 1]} : vector<8x128xf32> to vector<8x32xf32>
    %275 = arith.mulf %272, %256 : vector<8x32xf32>
    %276 = arith.mulf %271, %273 : vector<8x32xf32>
    %277 = arith.addf %275, %276 : vector<8x32xf32>
    %278 = math.tanh %277 : vector<8x32xf32>
    %279 = arith.mulf %274, %278 : vector<8x32xf32>
    %c3_i32_91 = arith.constant 3 : i32
    %c8_i32_92 = arith.constant 8 : i32
    %280 = arith.muli %c3_i32_91, %c8_i32_92 : i32
    %281 = tpu.assume_multiple %280, 8 : i32
    %282 = arith.index_cast %281 : i32 to index
    %c0_93 = arith.constant 0 : index
    %283 = vector.load %arg8[%282, %c0_93] : memref<64x128xf32, #tpu.memory_space<vmem>>, vector<8x128xf32>
    %cst_94 = arith.constant dense<0.000000e+00> : vector<8x128xf32>
    %284 = tpu.matmul %279, %214, %cst_94 {dimension_numbers = #tpu.dot_dimension_numbers<[1], [0], [0], [1], [0, 0, 1, 1], [], []>} : vector<8x32xf32>, vector<32x128xf32>, vector<8x128xf32> -> vector<8x128xf32>
    %285 = arith.addf %283, %284 : vector<8x128xf32>
    %286 = arith.negf %285 : vector<8x128xf32>
    %287 = math.exp %286 : vector<8x128xf32>
    %cst_95 = arith.constant 1.000000e+00 : f32
    %288 = vector.broadcast %cst_95 : f32 to vector<8x128xf32>
    %289 = arith.addf %288, %287 : vector<8x128xf32>
    %290 = arith.divf %288, %289 : vector<8x128xf32>
    %291 = math.tanh %285 : vector<8x128xf32>
    %292 = vector.extract_strided_slice %290 {offsets = [0, 0], sizes = [8, 32], strides = [1, 1]} : vector<8x128xf32> to vector<8x32xf32>
    %293 = vector.extract_strided_slice %290 {offsets = [0, 32], sizes = [8, 32], strides = [1, 1]} : vector<8x128xf32> to vector<8x32xf32>
    %294 = vector.extract_strided_slice %291 {offsets = [0, 64], sizes = [8, 32], strides = [1, 1]} : vector<8x128xf32> to vector<8x32xf32>
    %295 = vector.extract_strided_slice %290 {offsets = [0, 96], sizes = [8, 32], strides = [1, 1]} : vector<8x128xf32> to vector<8x32xf32>
    %296 = arith.mulf %293, %277 : vector<8x32xf32>
    %297 = arith.mulf %292, %294 : vector<8x32xf32>
    %298 = arith.addf %296, %297 : vector<8x32xf32>
    %299 = math.tanh %298 : vector<8x32xf32>
    %300 = arith.mulf %295, %299 : vector<8x32xf32>
    %c4_i32_96 = arith.constant 4 : i32
    %c8_i32_97 = arith.constant 8 : i32
    %301 = arith.muli %c4_i32_96, %c8_i32_97 : i32
    %302 = tpu.assume_multiple %301, 8 : i32
    %303 = arith.index_cast %302 : i32 to index
    %c0_98 = arith.constant 0 : index
    %304 = vector.load %arg8[%303, %c0_98] : memref<64x128xf32, #tpu.memory_space<vmem>>, vector<8x128xf32>
    %cst_99 = arith.constant dense<0.000000e+00> : vector<8x128xf32>
    %305 = tpu.matmul %300, %214, %cst_99 {dimension_numbers = #tpu.dot_dimension_numbers<[1], [0], [0], [1], [0, 0, 1, 1], [], []>} : vector<8x32xf32>, vector<32x128xf32>, vector<8x128xf32> -> vector<8x128xf32>
    %306 = arith.addf %304, %305 : vector<8x128xf32>
    %307 = arith.negf %306 : vector<8x128xf32>
    %308 = math.exp %307 : vector<8x128xf32>
    %cst_100 = arith.constant 1.000000e+00 : f32
    %309 = vector.broadcast %cst_100 : f32 to vector<8x128xf32>
    %310 = arith.addf %309, %308 : vector<8x128xf32>
    %311 = arith.divf %309, %310 : vector<8x128xf32>
    %312 = math.tanh %306 : vector<8x128xf32>
    %313 = vector.extract_strided_slice %311 {offsets = [0, 0], sizes = [8, 32], strides = [1, 1]} : vector<8x128xf32> to vector<8x32xf32>
    %314 = vector.extract_strided_slice %311 {offsets = [0, 32], sizes = [8, 32], strides = [1, 1]} : vector<8x128xf32> to vector<8x32xf32>
    %315 = vector.extract_strided_slice %312 {offsets = [0, 64], sizes = [8, 32], strides = [1, 1]} : vector<8x128xf32> to vector<8x32xf32>
    %316 = vector.extract_strided_slice %311 {offsets = [0, 96], sizes = [8, 32], strides = [1, 1]} : vector<8x128xf32> to vector<8x32xf32>
    %317 = arith.mulf %314, %298 : vector<8x32xf32>
    %318 = arith.mulf %313, %315 : vector<8x32xf32>
    %319 = arith.addf %317, %318 : vector<8x32xf32>
    %320 = math.tanh %319 : vector<8x32xf32>
    %321 = arith.mulf %316, %320 : vector<8x32xf32>
    %c5_i32_101 = arith.constant 5 : i32
    %c8_i32_102 = arith.constant 8 : i32
    %322 = arith.muli %c5_i32_101, %c8_i32_102 : i32
    %323 = tpu.assume_multiple %322, 8 : i32
    %324 = arith.index_cast %323 : i32 to index
    %c0_103 = arith.constant 0 : index
    %325 = vector.load %arg8[%324, %c0_103] : memref<64x128xf32, #tpu.memory_space<vmem>>, vector<8x128xf32>
    %cst_104 = arith.constant dense<0.000000e+00> : vector<8x128xf32>
    %326 = tpu.matmul %321, %214, %cst_104 {dimension_numbers = #tpu.dot_dimension_numbers<[1], [0], [0], [1], [0, 0, 1, 1], [], []>} : vector<8x32xf32>, vector<32x128xf32>, vector<8x128xf32> -> vector<8x128xf32>
    %327 = arith.addf %325, %326 : vector<8x128xf32>
    %328 = arith.negf %327 : vector<8x128xf32>
    %329 = math.exp %328 : vector<8x128xf32>
    %cst_105 = arith.constant 1.000000e+00 : f32
    %330 = vector.broadcast %cst_105 : f32 to vector<8x128xf32>
    %331 = arith.addf %330, %329 : vector<8x128xf32>
    %332 = arith.divf %330, %331 : vector<8x128xf32>
    %333 = math.tanh %327 : vector<8x128xf32>
    %334 = vector.extract_strided_slice %332 {offsets = [0, 0], sizes = [8, 32], strides = [1, 1]} : vector<8x128xf32> to vector<8x32xf32>
    %335 = vector.extract_strided_slice %332 {offsets = [0, 32], sizes = [8, 32], strides = [1, 1]} : vector<8x128xf32> to vector<8x32xf32>
    %336 = vector.extract_strided_slice %333 {offsets = [0, 64], sizes = [8, 32], strides = [1, 1]} : vector<8x128xf32> to vector<8x32xf32>
    %337 = vector.extract_strided_slice %332 {offsets = [0, 96], sizes = [8, 32], strides = [1, 1]} : vector<8x128xf32> to vector<8x32xf32>
    %338 = arith.mulf %335, %319 : vector<8x32xf32>
    %339 = arith.mulf %334, %336 : vector<8x32xf32>
    %340 = arith.addf %338, %339 : vector<8x32xf32>
    %341 = math.tanh %340 : vector<8x32xf32>
    %342 = arith.mulf %337, %341 : vector<8x32xf32>
    %c6_i32_106 = arith.constant 6 : i32
    %c8_i32_107 = arith.constant 8 : i32
    %343 = arith.muli %c6_i32_106, %c8_i32_107 : i32
    %344 = tpu.assume_multiple %343, 8 : i32
    %345 = arith.index_cast %344 : i32 to index
    %c0_108 = arith.constant 0 : index
    %346 = vector.load %arg8[%345, %c0_108] : memref<64x128xf32, #tpu.memory_space<vmem>>, vector<8x128xf32>
    %cst_109 = arith.constant dense<0.000000e+00> : vector<8x128xf32>
    %347 = tpu.matmul %342, %214, %cst_109 {dimension_numbers = #tpu.dot_dimension_numbers<[1], [0], [0], [1], [0, 0, 1, 1], [], []>} : vector<8x32xf32>, vector<32x128xf32>, vector<8x128xf32> -> vector<8x128xf32>
    %348 = arith.addf %346, %347 : vector<8x128xf32>
    %349 = arith.negf %348 : vector<8x128xf32>
    %350 = math.exp %349 : vector<8x128xf32>
    %cst_110 = arith.constant 1.000000e+00 : f32
    %351 = vector.broadcast %cst_110 : f32 to vector<8x128xf32>
    %352 = arith.addf %351, %350 : vector<8x128xf32>
    %353 = arith.divf %351, %352 : vector<8x128xf32>
    %354 = math.tanh %348 : vector<8x128xf32>
    %355 = vector.extract_strided_slice %353 {offsets = [0, 0], sizes = [8, 32], strides = [1, 1]} : vector<8x128xf32> to vector<8x32xf32>
    %356 = vector.extract_strided_slice %353 {offsets = [0, 32], sizes = [8, 32], strides = [1, 1]} : vector<8x128xf32> to vector<8x32xf32>
    %357 = vector.extract_strided_slice %354 {offsets = [0, 64], sizes = [8, 32], strides = [1, 1]} : vector<8x128xf32> to vector<8x32xf32>
    %358 = vector.extract_strided_slice %353 {offsets = [0, 96], sizes = [8, 32], strides = [1, 1]} : vector<8x128xf32> to vector<8x32xf32>
    %359 = arith.mulf %356, %340 : vector<8x32xf32>
    %360 = arith.mulf %355, %357 : vector<8x32xf32>
    %361 = arith.addf %359, %360 : vector<8x32xf32>
    %362 = math.tanh %361 : vector<8x32xf32>
    %363 = arith.mulf %358, %362 : vector<8x32xf32>
    %c7_i32_111 = arith.constant 7 : i32
    %c8_i32_112 = arith.constant 8 : i32
    %364 = arith.muli %c7_i32_111, %c8_i32_112 : i32
    %365 = tpu.assume_multiple %364, 8 : i32
    %366 = arith.index_cast %365 : i32 to index
    %c0_113 = arith.constant 0 : index
    %367 = vector.load %arg8[%366, %c0_113] : memref<64x128xf32, #tpu.memory_space<vmem>>, vector<8x128xf32>
    %cst_114 = arith.constant dense<0.000000e+00> : vector<8x128xf32>
    %368 = tpu.matmul %363, %214, %cst_114 {dimension_numbers = #tpu.dot_dimension_numbers<[1], [0], [0], [1], [0, 0, 1, 1], [], []>} : vector<8x32xf32>, vector<32x128xf32>, vector<8x128xf32> -> vector<8x128xf32>
    %369 = arith.addf %367, %368 : vector<8x128xf32>
    %370 = arith.negf %369 : vector<8x128xf32>
    %371 = math.exp %370 : vector<8x128xf32>
    %cst_115 = arith.constant 1.000000e+00 : f32
    %372 = vector.broadcast %cst_115 : f32 to vector<8x128xf32>
    %373 = arith.addf %372, %371 : vector<8x128xf32>
    %374 = arith.divf %372, %373 : vector<8x128xf32>
    %375 = math.tanh %369 : vector<8x128xf32>
    %376 = vector.extract_strided_slice %374 {offsets = [0, 0], sizes = [8, 32], strides = [1, 1]} : vector<8x128xf32> to vector<8x32xf32>
    %377 = vector.extract_strided_slice %374 {offsets = [0, 32], sizes = [8, 32], strides = [1, 1]} : vector<8x128xf32> to vector<8x32xf32>
    %378 = vector.extract_strided_slice %375 {offsets = [0, 64], sizes = [8, 32], strides = [1, 1]} : vector<8x128xf32> to vector<8x32xf32>
    %379 = vector.extract_strided_slice %374 {offsets = [0, 96], sizes = [8, 32], strides = [1, 1]} : vector<8x128xf32> to vector<8x32xf32>
    %380 = arith.mulf %377, %361 : vector<8x32xf32>
    %381 = arith.mulf %376, %378 : vector<8x32xf32>
    %382 = arith.addf %380, %381 : vector<8x32xf32>
    %383 = math.tanh %382 : vector<8x32xf32>
    %384 = arith.mulf %379, %383 : vector<8x32xf32>
    %c8_i32_116 = arith.constant 8 : i32
    %c0_117 = arith.constant 0 : index
    %c0_118 = arith.constant 0 : index
    %385 = vector.load %arg5[%c0_117, %c0_118] : memref<32x128xf32, #tpu.memory_space<vmem>>, vector<32x128xf32>
    %cst_119 = arith.constant dense<0.000000e+00> : vector<8x128xf32>
    %386 = tpu.matmul %384, %385, %cst_119 {dimension_numbers = #tpu.dot_dimension_numbers<[1], [0], [0], [1], [0, 0, 1, 1], [], []>} : vector<8x32xf32>, vector<32x128xf32>, vector<8x128xf32> -> vector<8x128xf32>
    %c0_120 = arith.constant 0 : index
    %c0_121 = arith.constant 0 : index
    %387 = vector.load %arg6[%c0_120, %c0_121] : memref<1x128xf32, #tpu.memory_space<vmem>>, vector<1x128xf32>
    %388 = vector.broadcast %387 : vector<1x128xf32> to vector<8x128xf32>
    %389 = arith.addf %386, %388 : vector<8x128xf32>
    %c1_122 = arith.constant 1 : index
    %c0_123 = arith.constant 0 : index
    %c0_124 = arith.constant 0 : index
    %390 = vector.load %arg7[%c1_122, %c0_123, %c0_124] : memref<2x8x128xf32, #tpu.memory_space<vmem>>, vector<1x8x128xf32>
    %391 = vector.shape_cast %390 : vector<1x8x128xf32> to vector<8x128xf32>
    %392 = vector.shape_cast %389 : vector<8x128xf32> to vector<1x8x128xf32>
    tpu.vector_store %arg7[%c1_122, %c0_123, %c0_124], %392 {strides = array<i32>} : memref<2x8x128xf32, #tpu.memory_space<vmem>>, vector<1x8x128xf32>,
    return
  }
}

</mosaic_0001>

<llo_original>
// kernel: tpu_custom_call.1
$region0: #{tpu_custom_call.1}
  #allocation0 [shape = 'u32[]', space=smem, size = 0x4, offset = 0x4, fixed_abs, tag = 'smem constant byte address 0x4 - core index']
  #allocation1 [shape = 'u32[144,128]{1,0:T(1,128)}', space=vmem, size = 0x12000, scoped, tag = 'internal scratch']
  #allocation2 [shape = 'f32[64,128]{1,0:T(8,128)}', space=vmem, size = 0x8000, scoped, tag = 'scratch operand']
  #allocation3 [shape = 'f32[64,32]{1,0:T(8,128)}', space=vmem, size = 0x8000, scoped, tag = 'scratch operand']
  %s0 = inlined_call_operand.vmem [shape: f32[64,10], index: 0, kind: input, shape index: {}]
  %s1 = inlined_call_operand.hbm [shape: f32[10,128], index: 1, kind: input, shape index: {}]
  %s2 = inlined_call_operand.hbm [shape: f32[1,32,128], index: 2, kind: input, shape index: {}]
  %s3 = inlined_call_operand.vmem [shape: f32[2,32,128], index: 3, kind: input, shape index: {}]
  %s4 = inlined_call_operand.vmem [shape: f32[2,1,128], index: 4, kind: input, shape index: {}]
  %s5 = inlined_call_operand.vmem [shape: f32[32,128], index: 5, kind: input, shape index: {}]
  %s6 = inlined_call_operand.vmem [shape: f32[1,128], index: 6, kind: input, shape index: {}]
  %s7 = inlined_call_operand.hbm [shape: f32[2,8,128], index: 7, kind: output, shape index: {}]
  %s8 = sld [smem:[#allocation0]]
  $region46: #{tpu_custom_call.1} parent=0
    _
  %s10 = ssub.s32 1, %s8
  %s11 = scalar_select 0, %s10, %s8
  $region1: #{tpu_custom_call.1} parent=0
    #allocation4 [shape = 'u8[8192]{0}', space=vmem, size = 0x2000, scoped, tag = 'input window, operand 1, single buffered']
    #allocation5 [shape = 's32[1]{0}', space=sflag, size = 0x4, scoped, tag = 'scoped memory for tpu_custom_call.1']
    #allocation6 [shape = 's32[1]{0}', space=sflag, size = 0x4, scoped, tag = 'scoped memory for tpu_custom_call.1']
    #allocation7 [shape = 'u8[16384]{0}', space=vmem, size = 0x4000, scoped, tag = 'input window, operand 2, single buffered']
    #allocation8 [shape = 's32[1]{0}', space=sflag, size = 0x4, scoped, tag = 'scoped memory for tpu_custom_call.1']
    #allocation9 [shape = 'u8[8192]{0}', space=vmem, size = 0x2000, scoped, tag = 'output window, operand 0, single buffered']
    %12 = vsyncpa [#allocation5], 0
    %13 = vsyncpa [#allocation8], 0
    %14 = vsyncpa [#allocation6], 0
    // Predicated region
    $region2: #{tpu_custom_call.1} parent=1 // pred_check
      _
    $region3: #{tpu_custom_call.1} parent=1 // pred_check_branch
      %16 = sbr.rel (0) target = $region5
    $region4: #{tpu_custom_call.1} parent=1 // pred_region
      _
    $region5: #{tpu_custom_call.1} parent=1 // pred_fallthru
      _
    // Predicated region
    $region6: #{tpu_custom_call.1} parent=1 // pred_check
      _
    $region7: #{tpu_custom_call.1} parent=1 // pred_check_branch
      %18 = sbr.rel (0) target = $region9
    $region8: #{tpu_custom_call.1} parent=1 // pred_region
      %s20 = ssub.s32 256, 256
      %21 = vsyncadd [#allocation5], %s20
      %s22 = sshll.u32 [#allocation4], 4
      %s23 = int_to_ptr.vmem [resolvable:$true] %s22
      %28 = dma.hbm_to_vmem [thread:$0]  %s1, 256, %s23, [#allocation5], 128, 128, 8
    $region9: #{tpu_custom_call.1} parent=1 // pred_fallthru
      _
    // Predicated region
    $region10: #{tpu_custom_call.1} parent=1 // pred_check
      _
    $region11: #{tpu_custom_call.1} parent=1 // pred_check_branch
      %30 = sbr.rel (0) target = $region13
    $region12: #{tpu_custom_call.1} parent=1 // pred_region
      %s32 = ssub.s32 512, 512
      %33 = vsyncadd [#allocation8], %s32
      %s34 = sshll.u32 [#allocation7], 4
      %s35 = int_to_ptr.vmem [resolvable:$true] %s34
      %40 = dma.hbm_to_vmem [thread:$0]  %s2, 512, %s35, [#allocation8], 128, 128, 8
    $region13: #{tpu_custom_call.1} parent=1 // pred_fallthru
      _
    // Predicated region
    $region14: #{tpu_custom_call.1} parent=1 // pred_check
      _
    $region15: #{tpu_custom_call.1} parent=1 // pred_check_branch
      %42 = sbr.rel (0) target = $region17
    $region16: #{tpu_custom_call.1} parent=1 // pred_region
      _
    $region17: #{tpu_custom_call.1} parent=1 // pred_fallthru
      _
    // Predicated region
    $region18: #{tpu_custom_call.1} parent=1 // pred_check
      _
    $region19: #{tpu_custom_call.1} parent=1 // pred_check_branch
      %44 = sbr.rel (0) target = $region21
    $region20: #{tpu_custom_call.1} parent=1 // pred_region
      _
    $region21: #{tpu_custom_call.1} parent=1 // pred_fallthru
      _
    // Predicated region
    $region22: #{tpu_custom_call.1} parent=1 // pred_check
      _
    $region23: #{tpu_custom_call.1} parent=1 // pred_check_branch
      %46 = sbr.rel (0) target = $region25
    $region24: #{tpu_custom_call.1} parent=1 // pred_region
      _
    $region25: #{tpu_custom_call.1} parent=1 // pred_fallthru
      _
    // Predicated region
    $region26: #{tpu_custom_call.1} parent=1 // pred_check
      _
    $region27: #{tpu_custom_call.1} parent=1 // pred_check_branch
      %48 = sbr.rel (0) target = $region29
    $region28: #{tpu_custom_call.1} parent=1 // pred_region
      _
    $region29: #{tpu_custom_call.1} parent=1 // pred_fallthru
      _
    // Predicated region
    $region30: #{tpu_custom_call.1} parent=1 // pred_check
      _
    $region31: #{tpu_custom_call.1} parent=1 // pred_check_branch
      %50 = sbr.rel (0) target = $region33
    $region32: #{tpu_custom_call.1} parent=1 // pred_region
      %51 = dma.done [#allocation5], 256
    $region33: #{tpu_custom_call.1} parent=1 // pred_fallthru
      _
    // Predicated region
    $region34: #{tpu_custom_call.1} parent=1 // pred_check
      _
    $region35: #{tpu_custom_call.1} parent=1 // pred_check_branch
      %53 = sbr.rel (0) target = $region37
    $region36: #{tpu_custom_call.1} parent=1 // pred_region
      %54 = dma.done [#allocation8], 512
    $region37: #{tpu_custom_call.1} parent=1 // pred_fallthru
      _
    %v55 = vld [vmem:[%s0] sm:$0xff]
    %v56 = vld [vmem:[%s0 + $0x8] sm:$0xff]
    %v57 = vld [vmem:[%s0 + $0x10] sm:$0xff]
    %v58 = vld [vmem:[%s0 + $0x18] sm:$0xff]
    %v59 = vld [vmem:[%s0 + $0x20] sm:$0xff]
    %v60 = vld [vmem:[%s0 + $0x28] sm:$0xff]
    %v61 = vld [vmem:[%s0 + $0x30] sm:$0xff]
    %v62 = vld [vmem:[%s0 + $0x38] sm:$0xff]
    %v63 = vld [vmem:[#allocation4] sm:$0xff]
    %v64 = vld [vmem:[#allocation4 + $0x8] sm:$0x3]
    %v65 = vld [vmem:[%s4] sm:$0x1]
    %v67 = vlaneseq
    %v68 = vshrl.u32 %v67, 7
    %v69 = vsub.s32 0, %v68
    %v70 = vrot.slane %v65, %v69
    %vm72 = vcmask 80896
    %v74 = vsel %vm72, %v55, 0
    %v77 = vsel %vm72, %v56, 0
    %v80 = vsel %vm72, %v57, 0
    %v83 = vsel %vm72, %v58, 0
    %v86 = vsel %vm72, %v59, 0
    %v89 = vsel %vm72, %v60, 0
    %v92 = vsel %vm72, %v61, 0
    %v95 = vsel %vm72, %v62, 0
    %vm97 = vcmask 1041408
    %v99 = vsel %vm97, %v64, 0
    %101 = vmatprep.subr.mxu0 0.0
    %102 = vmatpush1.msra.mxu0 %v63
    %103 = vmatprep.subr.mxu0 0.0
    %104 = vmatpush1.msra.mxu0 %v99
    %105 = vmatprep.subr.mxu0 0.0
    %106 = vmatpush1.msra.mxu0 0.0
    %107 = vmatprep.subr.mxu0 0.0
    %108 = vmatpush1.msra.mxu0 0.0
    %109 = vmatprep.subr.mxu0 0.0
    %110 = vmatpush1.msra.mxu0 0.0
    %111 = vmatprep.subr.mxu0 0.0
    %112 = vmatpush1.msra.mxu0 0.0
    %113 = vmatprep.subr.mxu0 0.0
    %114 = vmatpush1.msra.mxu0 0.0
    %115 = vmatprep.subr.mxu0 0.0
    %116 = vmatpush1.msra.mxu0 0.0
    %117 = vmatprep.subr.mxu0 0.0
    %118 = vmatpush1.msra.mxu0 0.0
    %119 = vmatprep.subr.mxu0 0.0
    %120 = vmatpush1.msra.mxu0 0.0
    %121 = vmatprep.subr.mxu0 0.0
    %122 = vmatpush1.msra.mxu0 0.0
    %123 = vmatprep.subr.mxu0 0.0
    %124 = vmatpush1.msra.mxu0 0.0
    %125 = vmatprep.subr.mxu0 0.0
    %126 = vmatpush1.msra.mxu0 0.0
    %127 = vmatprep.subr.mxu0 0.0
    %128 = vmatpush1.msra.mxu0 0.0
    %129 = vmatprep.subr.mxu0 0.0
    %130 = vmatpush1.msra.mxu0 0.0
    %131 = vmatprep.subr.mxu0 0.0
    %132 = vmatpush1.msra.mxu0 0.0
    %133 = vmatprep.subr.mxu0 0.0
    %134 = vmatpush1.msra.mxu0 0.0
    %135 = vmatprep.subr.mxu0 0.0
    %136 = vmatpush1.msra.mxu0 0.0
    %137 = vmatprep.subr.mxu0 0.0
    %138 = vmatpush1.msra.mxu0 0.0
    %139 = vmatprep.subr.mxu0 0.0
    %140 = vmatpush1.msra.mxu0 0.0
    %141 = vmatprep.subr.mxu0 0.0
    %142 = vmatpush1.msra.mxu0 0.0
    %143 = vmatprep.subr.mxu0 0.0
    %144 = vmatpush1.msra.mxu0 0.0
    %145 = vmatprep.subr.mxu0 0.0
    %146 = vmatpush1.msra.mxu0 0.0
    %147 = vmatprep.subr.mxu0 0.0
    %148 = vmatpush1.msra.mxu0 0.0
    %149 = vmatprep.subr.mxu0 0.0
    %150 = vmatpush1.msra.mxu0 0.0
    %151 = vmatprep.subr.mxu0 0.0
    %152 = vmatpush1.msra.mxu0 0.0
    %153 = vmatprep.subr.mxu0 0.0
    %154 = vmatpush1.msra.mxu0 0.0
    %155 = vmatprep.subr.mxu0 0.0
    %156 = vmatpush1.msra.mxu0 0.0
    %157 = vmatprep.subr.mxu0 0.0
    %158 = vmatpush1.msra.mxu0 0.0
    %159 = vmatprep.subr.mxu0 0.0
    %160 = vmatpush1.msra.mxu0 0.0
    %161 = vmatprep.subr.mxu0 0.0
    %162 = vmatpush1.msra.mxu0 0.0
    %163 = vmatprep.subr.mxu0 0.0
    %164 = vmatpush1.msra.mxu0 0.0
    %165 = vmatprep.mubr.f32.mxu0 0.0
    %166 = vmatmul.mubr.f32.gmra.mrb[0].mxu0 %v74
    %v167 = vpop.f32.mrb[0].mxu0
    %v168 = vadd.f32 %v70, %v167
    %v169 = vpop.f32.mrb[0].mxu0
    %170 = vmatprep.mubr.f32.mxu0 0.0
    %171 = vmatmul.mubr.f32.gmra.mrb[0].mxu0 %v77
    %v172 = vpop.f32.mrb[0].mxu0
    %v173 = vadd.f32 %v70, %v172
    %v174 = vpop.f32.mrb[0].mxu0
    %175 = vmatprep.mubr.f32.mxu0 0.0
    %176 = vmatmul.mubr.f32.gmra.mrb[0].mxu0 %v80
    %v177 = vpop.f32.mrb[0].mxu0
    %v178 = vadd.f32 %v70, %v177
    %v179 = vpop.f32.mrb[0].mxu0
    %180 = vmatprep.mubr.f32.mxu0 0.0
    %181 = vmatmul.mubr.f32.gmra.mrb[0].mxu0 %v83
    %v182 = vpop.f32.mrb[0].mxu0
    %v183 = vadd.f32 %v70, %v182
    %v184 = vpop.f32.mrb[0].mxu0
    %185 = vmatprep.mubr.f32.mxu0 0.0
    %186 = vmatmul.mubr.f32.gmra.mrb[0].mxu0 %v86
    %v187 = vpop.f32.mrb[0].mxu0
    %v188 = vadd.f32 %v70, %v187
    %v189 = vpop.f32.mrb[0].mxu0
    %190 = vmatprep.mubr.f32.mxu0 0.0
    %191 = vmatmul.mubr.f32.gmra.mrb[0].mxu0 %v89
    %v192 = vpop.f32.mrb[0].mxu0
    %v193 = vadd.f32 %v70, %v192
    %v194 = vpop.f32.mrb[0].mxu0
    %195 = vmatprep.mubr.f32.mxu0 0.0
    %196 = vmatmul.mubr.f32.gmra.mrb[0].mxu0 %v92
    %v197 = vpop.f32.mrb[0].mxu0
    %v198 = vadd.f32 %v70, %v197
    %v199 = vpop.f32.mrb[0].mxu0
    %200 = vmatprep.mubr.f32.mxu0 0.0
    %201 = vmatmul.mubr.f32.gmra.mrb[0].mxu0 %v95
    %v202 = vpop.f32.mrb[0].mxu0
    %v203 = vadd.f32 %v70, %v202
    %v204 = vpop.f32.mrb[0].mxu0
    %205 = vdwg.mxu0
    %206 = vst [vmem:[#allocation2] sm:$0xff] %v168
    %207 = vst [vmem:[#allocation2 + $0x8] sm:$0xff] %v173
    %208 = vst [vmem:[#allocation2 + $0x10] sm:$0xff] %v178
    %209 = vst [vmem:[#allocation2 + $0x18] sm:$0xff] %v183
    %210 = vst [vmem:[#allocation2 + $0x20] sm:$0xff] %v188
    %211 = vst [vmem:[#allocation2 + $0x28] sm:$0xff] %v193
    %212 = vst [vmem:[#allocation2 + $0x30] sm:$0xff] %v198
    %213 = vst [vmem:[#allocation2 + $0x38] sm:$0xff] %v203
    %v214 = vld [vmem:[%s3] sm:$0xff]
    %v215 = vld [vmem:[%s3 + $0x8] sm:$0xff]
    %v216 = vld [vmem:[%s3 + $0x10] sm:$0xff]
    %v217 = vld [vmem:[%s3 + $0x18] sm:$0xff]
    %v218 = vld [vmem:[#allocation2] sm:$0xff]
    %vm219 = vcmask 261120
    %v221 = vsel %vm219, 0.0, 0
    %223 = vmatprep.subr.mxu0 0.0
    %224 = vmatpush1.msra.mxu0 %v214
    %225 = vmatprep.subr.mxu0 0.0
    %226 = vmatpush1.msra.mxu0 %v215
    %227 = vmatprep.subr.mxu0 0.0
    %228 = vmatpush1.msra.mxu0 %v216
    %229 = vmatprep.subr.mxu0 0.0
    %230 = vmatpush1.msra.mxu0 %v217
    %231 = vmatprep.subr.mxu0 0.0
    %232 = vmatpush1.msra.mxu0 0.0
    %233 = vmatprep.subr.mxu0 0.0
    %234 = vmatpush1.msra.mxu0 0.0
    %235 = vmatprep.subr.mxu0 0.0
    %236 = vmatpush1.msra.mxu0 0.0
    %237 = vmatprep.subr.mxu0 0.0
    %238 = vmatpush1.msra.mxu0 0.0
    %239 = vmatprep.subr.mxu0 0.0
    %240 = vmatpush1.msra.mxu0 0.0
    %241 = vmatprep.subr.mxu0 0.0
    %242 = vmatpush1.msra.mxu0 0.0
    %243 = vmatprep.subr.mxu0 0.0
    %244 = vmatpush1.msra.mxu0 0.0
    %245 = vmatprep.subr.mxu0 0.0
    %246 = vmatpush1.msra.mxu0 0.0
    %247 = vmatprep.subr.mxu0 0.0
    %248 = vmatpush1.msra.mxu0 0.0
    %249 = vmatprep.subr.mxu0 0.0
    %250 = vmatpush1.msra.mxu0 0.0
    %251 = vmatprep.subr.mxu0 0.0
    %252 = vmatpush1.msra.mxu0 0.0
    %253 = vmatprep.subr.mxu0 0.0
    %254 = vmatpush1.msra.mxu0 0.0
    %255 = vmatprep.subr.mxu0 0.0
    %256 = vmatpush1.msra.mxu0 0.0
    %257 = vmatprep.subr.mxu0 0.0
    %258 = vmatpush1.msra.mxu0 0.0
    %259 = vmatprep.subr.mxu0 0.0
    %260 = vmatpush1.msra.mxu0 0.0
    %261 = vmatprep.subr.mxu0 0.0
    %262 = vmatpush1.msra.mxu0 0.0
    %263 = vmatprep.subr.mxu0 0.0
    %264 = vmatpush1.msra.mxu0 0.0
    %265 = vmatprep.subr.mxu0 0.0
    %266 = vmatpush1.msra.mxu0 0.0
    %267 = vmatprep.subr.mxu0 0.0
    %268 = vmatpush1.msra.mxu0 0.0
    %269 = vmatprep.subr.mxu0 0.0
    %270 = vmatpush1.msra.mxu0 0.0
    %271 = vmatprep.subr.mxu0 0.0
    %272 = vmatpush1.msra.mxu0 0.0
    %273 = vmatprep.subr.mxu0 0.0
    %274 = vmatpush1.msra.mxu0 0.0
    %275 = vmatprep.subr.mxu0 0.0
    %276 = vmatpush1.msra.mxu0 0.0
    %277 = vmatprep.subr.mxu0 0.0
    %278 = vmatpush1.msra.mxu0 0.0
    %279 = vmatprep.subr.mxu0 0.0
    %280 = vmatpush1.msra.mxu0 0.0
    %281 = vmatprep.subr.mxu0 0.0
    %282 = vmatpush1.msra.mxu0 0.0
    %283 = vmatprep.subr.mxu0 0.0
    %284 = vmatpush1.msra.mxu0 0.0
    %285 = vmatprep.subr.mxu0 0.0
    %286 = vmatpush1.msra.mxu0 0.0
    %287 = vmatprep.mubr.f32.mxu0 0.0
    %288 = vmatmul.mubr.f32.gmra.mrb[0].mxu0 %v221
    %v289 = vpop.f32.mrb[0].mxu0
    %v290 = vadd.f32 0.0, %v289
    %v291 = vpop.f32.mrb[0].mxu0
    %292 = vdwg.mxu0
    %v293 = vadd.f32 %v218, %v290
    %v294 = vxor.u32 %v293, 2147483648
    %v295 = vmul.f32 %v294, 1.442695
    %v296 = vpow.pop %v295
    %v297 = vadd.f32 %v296, 1.0
    %v298 = vrcp.pop %v297
    %v299 = vmul.f32 1.0, %v298
    %v300 = vtanh.pop %v293
    %v301 = vmul.f32 %v299, 0.0
    %303 = vrot.lane.b32.xlu0 %v300, 64
    %v304 = vpop.permute.xlu0 %303
    %v306 = vmul.f32 %v299, %v304
    %308 = vrot.lane.b32.xlu0 %v306, 32
    %v309 = vpop.permute.xlu0 %308
    %v311 = vadd.f32 %v301, %v309
    %v312 = vtanh.pop %v311
    %314 = vrot.lane.b32.xlu0 %v312, 64
    %v315 = vpop.permute.xlu0 %314
    %v317 = vmul.f32 %v299, %v315
    %319 = vrot.lane.b32.xlu0 %v317, 32
    %v320 = vpop.permute.xlu0 %319
    %322 = vst.msk [vmem:[#allocation3] sm:$0xff] %vm219, %v320
    %s323 = scalar_lea.vmem [#allocation2], 8
    %v324 = vld [vmem:[%s323] sm:$0xff]
    %v325 = vsel %vm219, %v320, 0
    %327 = vmatprep.subr.mxu0 0.0
    %328 = vmatpush1.msra.mxu0 %v214
    %329 = vmatprep.subr.mxu0 0.0
    %330 = vmatpush1.msra.mxu0 %v215
    %331 = vmatprep.subr.mxu0 0.0
    %332 = vmatpush1.msra.mxu0 %v216
    %333 = vmatprep.subr.mxu0 0.0
    %334 = vmatpush1.msra.mxu0 %v217
    %335 = vmatprep.subr.mxu0 0.0
    %336 = vmatpush1.msra.mxu0 0.0
    %337 = vmatprep.subr.mxu0 0.0
    %338 = vmatpush1.msra.mxu0 0.0
    %339 = vmatprep.subr.mxu0 0.0
    %340 = vmatpush1.msra.mxu0 0.0
    %341 = vmatprep.subr.mxu0 0.0
    %342 = vmatpush1.msra.mxu0 0.0
    %343 = vmatprep.subr.mxu0 0.0
    %344 = vmatpush1.msra.mxu0 0.0
    %345 = vmatprep.subr.mxu0 0.0
    %346 = vmatpush1.msra.mxu0 0.0
    %347 = vmatprep.subr.mxu0 0.0
    %348 = vmatpush1.msra.mxu0 0.0
    %349 = vmatprep.subr.mxu0 0.0
    %350 = vmatpush1.msra.mxu0 0.0
    %351 = vmatprep.subr.mxu0 0.0
    %352 = vmatpush1.msra.mxu0 0.0
    %353 = vmatprep.subr.mxu0 0.0
    %354 = vmatpush1.msra.mxu0 0.0
    %355 = vmatprep.subr.mxu0 0.0
    %356 = vmatpush1.msra.mxu0 0.0
    %357 = vmatprep.subr.mxu0 0.0
    %358 = vmatpush1.msra.mxu0 0.0
    %359 = vmatprep.subr.mxu0 0.0
    %360 = vmatpush1.msra.mxu0 0.0
    %361 = vmatprep.subr.mxu0 0.0
    %362 = vmatpush1.msra.mxu0 0.0
    %363 = vmatprep.subr.mxu0 0.0
    %364 = vmatpush1.msra.mxu0 0.0
    %365 = vmatprep.subr.mxu0 0.0
    %366 = vmatpush1.msra.mxu0 0.0
    %367 = vmatprep.subr.mxu0 0.0
    %368 = vmatpush1.msra.mxu0 0.0
    %369 = vmatprep.subr.mxu0 0.0
    %370 = vmatpush1.msra.mxu0 0.0
    %371 = vmatprep.subr.mxu0 0.0
    %372 = vmatpush1.msra.mxu0 0.0
    %373 = vmatprep.subr.mxu0 0.0
    %374 = vmatpush1.msra.mxu0 0.0
    %375 = vmatprep.subr.mxu0 0.0
    %376 = vmatpush1.msra.mxu0 0.0
    %377 = vmatprep.subr.mxu0 0.0
    %378 = vmatpush1.msra.mxu0 0.0
    %379 = vmatprep.subr.mxu0 0.0
    %380 = vmatpush1.msra.mxu0 0.0
    %381 = vmatprep.subr.mxu0 0.0
    %382 = vmatpush1.msra.mxu0 0.0
    %383 = vmatprep.subr.mxu0 0.0
    %384 = vmatpush1.msra.mxu0 0.0
    %385 = vmatprep.subr.mxu0 0.0
    %386 = vmatpush1.msra.mxu0 0.0
    %387 = vmatprep.subr.mxu0 0.0
    %388 = vmatpush1.msra.mxu0 0.0
    %389 = vmatprep.subr.mxu0 0.0
    %390 = vmatpush1.msra.mxu0 0.0
    %391 = vmatprep.mubr.f32.mxu0 0.0
    %392 = vmatmul.mubr.f32.gmra.mrb[0].mxu0 %v325
    %v393 = vpop.f32.mrb[0].mxu0
    %v394 = vadd.f32 0.0, %v393
    %v395 = vpop.f32.mrb[0].mxu0
    %396 = vdwg.mxu0
    %v397 = vadd.f32 %v324, %v394
    %v398 = vxor.u32 %v397, 2147483648
    %v399 = vmul.f32 %v398, 1.442695
    %v400 = vpow.pop %v399
    %v401 = vadd.f32 %v400, 1.0
    %v402 = vrcp.pop %v401
    %v403 = vmul.f32 1.0, %v402
    %v404 = vtanh.pop %v397
    %v405 = vmul.f32 %v403, %v311
    %407 = vrot.lane.b32.xlu0 %v404, 64
    %v408 = vpop.permute.xlu0 %407
    %v410 = vmul.f32 %v403, %v408
    %412 = vrot.lane.b32.xlu0 %v410, 32
    %v413 = vpop.permute.xlu0 %412
    %v415 = vadd.f32 %v405, %v413
    %v416 = vtanh.pop %v415
    %418 = vrot.lane.b32.xlu0 %v416, 64
    %v419 = vpop.permute.xlu0 %418
    %v421 = vmul.f32 %v403, %v419
    %423 = vrot.lane.b32.xlu0 %v421, 32
    %v424 = vpop.permute.xlu0 %423
    %s426 = scalar_lea.vmem [#allocation3], 8
    %427 = vst.msk [vmem:[%s426] sm:$0xff] %vm219, %v424
    %s428 = scalar_lea.vmem [#allocation2], 16
    %v429 = vld [vmem:[%s428] sm:$0xff]
    %v430 = vsel %vm219, %v424, 0
    %432 = vmatprep.subr.mxu0 0.0
    %433 = vmatpush1.msra.mxu0 %v214
    %434 = vmatprep.subr.mxu0 0.0
    %435 = vmatpush1.msra.mxu0 %v215
    %436 = vmatprep.subr.mxu0 0.0
    %437 = vmatpush1.msra.mxu0 %v216
    %438 = vmatprep.subr.mxu0 0.0
    %439 = vmatpush1.msra.mxu0 %v217
    %440 = vmatprep.subr.mxu0 0.0
    %441 = vmatpush1.msra.mxu0 0.0
    %442 = vmatprep.subr.mxu0 0.0
    %443 = vmatpush1.msra.mxu0 0.0
    %444 = vmatprep.subr.mxu0 0.0
    %445 = vmatpush1.msra.mxu0 0.0
    %446 = vmatprep.subr.mxu0 0.0
    %447 = vmatpush1.msra.mxu0 0.0
    %448 = vmatprep.subr.mxu0 0.0
    %449 = vmatpush1.msra.mxu0 0.0
    %450 = vmatprep.subr.mxu0 0.0
    %451 = vmatpush1.msra.mxu0 0.0
    %452 = vmatprep.subr.mxu0 0.0
    %453 = vmatpush1.msra.mxu0 0.0
    %454 = vmatprep.subr.mxu0 0.0
    %455 = vmatpush1.msra.mxu0 0.0
    %456 = vmatprep.subr.mxu0 0.0
    %457 = vmatpush1.msra.mxu0 0.0
    %458 = vmatprep.subr.mxu0 0.0
    %459 = vmatpush1.msra.mxu0 0.0
    %460 = vmatprep.subr.mxu0 0.0
    %461 = vmatpush1.msra.mxu0 0.0
    %462 = vmatprep.subr.mxu0 0.0
    %463 = vmatpush1.msra.mxu0 0.0
    %464 = vmatprep.subr.mxu0 0.0
    %465 = vmatpush1.msra.mxu0 0.0
    %466 = vmatprep.subr.mxu0 0.0
    %467 = vmatpush1.msra.mxu0 0.0
    %468 = vmatprep.subr.mxu0 0.0
    %469 = vmatpush1.msra.mxu0 0.0
    %470 = vmatprep.subr.mxu0 0.0
    %471 = vmatpush1.msra.mxu0 0.0
    %472 = vmatprep.subr.mxu0 0.0
    %473 = vmatpush1.msra.mxu0 0.0
    %474 = vmatprep.subr.mxu0 0.0
    %475 = vmatpush1.msra.mxu0 0.0
    %476 = vmatprep.subr.mxu0 0.0
    %477 = vmatpush1.msra.mxu0 0.0
    %478 = vmatprep.subr.mxu0 0.0
    %479 = vmatpush1.msra.mxu0 0.0
    %480 = vmatprep.subr.mxu0 0.0
    %481 = vmatpush1.msra.mxu0 0.0
    %482 = vmatprep.subr.mxu0 0.0
    %483 = vmatpush1.msra.mxu0 0.0
    %484 = vmatprep.subr.mxu0 0.0
    %485 = vmatpush1.msra.mxu0 0.0
    %486 = vmatprep.subr.mxu0 0.0
    %487 = vmatpush1.msra.mxu0 0.0
    %488 = vmatprep.subr.mxu0 0.0
    %489 = vmatpush1.msra.mxu0 0.0
    %490 = vmatprep.subr.mxu0 0.0
    %491 = vmatpush1.msra.mxu0 0.0
    %492 = vmatprep.subr.mxu0 0.0
    %493 = vmatpush1.msra.mxu0 0.0
    %494 = vmatprep.subr.mxu0 0.0
    %495 = vmatpush1.msra.mxu0 0.0
    %496 = vmatprep.mubr.f32.mxu0 0.0
    %497 = vmatmul.mubr.f32.gmra.mrb[0].mxu0 %v430
    %v498 = vpop.f32.mrb[0].mxu0
    %v499 = vadd.f32 0.0, %v498
    %v500 = vpop.f32.mrb[0].mxu0
    %501 = vdwg.mxu0
    %v502 = vadd.f32 %v429, %v499
    %v503 = vxor.u32 %v502, 2147483648
    %v504 = vmul.f32 %v503, 1.442695
    %v505 = vpow.pop %v504
    %v506 = vadd.f32 %v505, 1.0
    %v507 = vrcp.pop %v506
    %v508 = vmul.f32 1.0, %v507
    %v509 = vtanh.pop %v502
    %v510 = vmul.f32 %v508, %v415
    %512 = vrot.lane.b32.xlu0 %v509, 64
    %v513 = vpop.permute.xlu0 %512
    %v515 = vmul.f32 %v508, %v513
    %517 = vrot.lane.b32.xlu0 %v515, 32
    %v518 = vpop.permute.xlu0 %517
    %v520 = vadd.f32 %v510, %v518
    %v521 = vtanh.pop %v520
    %523 = vrot.lane.b32.xlu0 %v521, 64
    %v524 = vpop.permute.xlu0 %523
    %v526 = vmul.f32 %v508, %v524
    %528 = vrot.lane.b32.xlu0 %v526, 32
    %v529 = vpop.permute.xlu0 %528
    %s531 = scalar_lea.vmem [#allocation3], 16
    %532 = vst.msk [vmem:[%s531] sm:$0xff] %vm219, %v529
    %s533 = scalar_lea.vmem [#allocation2], 24
    %v534 = vld [vmem:[%s533] sm:$0xff]
    %v535 = vsel %vm219, %v529, 0
    %537 = vmatprep.subr.mxu0 0.0
    %538 = vmatpush1.msra.mxu0 %v214
    %539 = vmatprep.subr.mxu0 0.0
    %540 = vmatpush1.msra.mxu0 %v215
    %541 = vmatprep.subr.mxu0 0.0
    %542 = vmatpush1.msra.mxu0 %v216
    %543 = vmatprep.subr.mxu0 0.0
    %544 = vmatpush1.msra.mxu0 %v217
    %545 = vmatprep.subr.mxu0 0.0
    %546 = vmatpush1.msra.mxu0 0.0
    %547 = vmatprep.subr.mxu0 0.0
    %548 = vmatpush1.msra.mxu0 0.0
    %549 = vmatprep.subr.mxu0 0.0
    %550 = vmatpush1.msra.mxu0 0.0
    %551 = vmatprep.subr.mxu0 0.0
    %552 = vmatpush1.msra.mxu0 0.0
    %553 = vmatprep.subr.mxu0 0.0
    %554 = vmatpush1.msra.mxu0 0.0
    %555 = vmatprep.subr.mxu0 0.0
    %556 = vmatpush1.msra.mxu0 0.0
    %557 = vmatprep.subr.mxu0 0.0
    %558 = vmatpush1.msra.mxu0 0.0
    %559 = vmatprep.subr.mxu0 0.0
    %560 = vmatpush1.msra.mxu0 0.0
    %561 = vmatprep.subr.mxu0 0.0
    %562 = vmatpush1.msra.mxu0 0.0
    %563 = vmatprep.subr.mxu0 0.0
    %564 = vmatpush1.msra.mxu0 0.0
    %565 = vmatprep.subr.mxu0 0.0
    %566 = vmatpush1.msra.mxu0 0.0
    %567 = vmatprep.subr.mxu0 0.0
    %568 = vmatpush1.msra.mxu0 0.0
    %569 = vmatprep.subr.mxu0 0.0
    %570 = vmatpush1.msra.mxu0 0.0
    %571 = vmatprep.subr.mxu0 0.0
    %572 = vmatpush1.msra.mxu0 0.0
    %573 = vmatprep.subr.mxu0 0.0
    %574 = vmatpush1.msra.mxu0 0.0
    %575 = vmatprep.subr.mxu0 0.0
    %576 = vmatpush1.msra.mxu0 0.0
    %577 = vmatprep.subr.mxu0 0.0
    %578 = vmatpush1.msra.mxu0 0.0
    %579 = vmatprep.subr.mxu0 0.0
    %580 = vmatpush1.msra.mxu0 0.0
    %581 = vmatprep.subr.mxu0 0.0
    %582 = vmatpush1.msra.mxu0 0.0
    %583 = vmatprep.subr.mxu0 0.0
    %584 = vmatpush1.msra.mxu0 0.0
    %585 = vmatprep.subr.mxu0 0.0
    %586 = vmatpush1.msra.mxu0 0.0
    %587 = vmatprep.subr.mxu0 0.0
    %588 = vmatpush1.msra.mxu0 0.0
    %589 = vmatprep.subr.mxu0 0.0
    %590 = vmatpush1.msra.mxu0 0.0
    %591 = vmatprep.subr.mxu0 0.0
    %592 = vmatpush1.msra.mxu0 0.0
    %593 = vmatprep.subr.mxu0 0.0
    %594 = vmatpush1.msra.mxu0 0.0
    %595 = vmatprep.subr.mxu0 0.0
    %596 = vmatpush1.msra.mxu0 0.0
    %597 = vmatprep.subr.mxu0 0.0
    %598 = vmatpush1.msra.mxu0 0.0
    %599 = vmatprep.subr.mxu0 0.0
    %600 = vmatpush1.msra.mxu0 0.0
    %601 = vmatprep.mubr.f32.mxu0 0.0
    %602 = vmatmul.mubr.f32.gmra.mrb[0].mxu0 %v535
    %v603 = vpop.f32.mrb[0].mxu0
    %v604 = vadd.f32 0.0, %v603
    %v605 = vpop.f32.mrb[0].mxu0
    %606 = vdwg.mxu0
    %v607 = vadd.f32 %v534, %v604
    %v608 = vxor.u32 %v607, 2147483648
    %v609 = vmul.f32 %v608, 1.442695
    %v610 = vpow.pop %v609
    %v611 = vadd.f32 %v610, 1.0
    %v612 = vrcp.pop %v611
    %v613 = vmul.f32 1.0, %v612
    %v614 = vtanh.pop %v607
    %v615 = vmul.f32 %v613, %v520
    %617 = vrot.lane.b32.xlu0 %v614, 64
    %v618 = vpop.permute.xlu0 %617
    %v620 = vmul.f32 %v613, %v618
    %622 = vrot.lane.b32.xlu0 %v620, 32
    %v623 = vpop.permute.xlu0 %622
    %v625 = vadd.f32 %v615, %v623
    %v626 = vtanh.pop %v625
    %628 = vrot.lane.b32.xlu0 %v626, 64
    %v629 = vpop.permute.xlu0 %628
    %v631 = vmul.f32 %v613, %v629
    %633 = vrot.lane.b32.xlu0 %v631, 32
    %v634 = vpop.permute.xlu0 %633
    %s636 = scalar_lea.vmem [#allocation3], 24
    %637 = vst.msk [vmem:[%s636] sm:$0xff] %vm219, %v634
    %s638 = scalar_lea.vmem [#allocation2], 32
    %v639 = vld [vmem:[%s638] sm:$0xff]
    %v640 = vsel %vm219, %v634, 0
    %642 = vmatprep.subr.mxu0 0.0
    %643 = vmatpush1.msra.mxu0 %v214
    %644 = vmatprep.subr.mxu0 0.0
    %645 = vmatpush1.msra.mxu0 %v215
    %646 = vmatprep.subr.mxu0 0.0
    %647 = vmatpush1.msra.mxu0 %v216
    %648 = vmatprep.subr.mxu0 0.0
    %649 = vmatpush1.msra.mxu0 %v217
    %650 = vmatprep.subr.mxu0 0.0
    %651 = vmatpush1.msra.mxu0 0.0
    %652 = vmatprep.subr.mxu0 0.0
    %653 = vmatpush1.msra.mxu0 0.0
    %654 = vmatprep.subr.mxu0 0.0
    %655 = vmatpush1.msra.mxu0 0.0
    %656 = vmatprep.subr.mxu0 0.0
    %657 = vmatpush1.msra.mxu0 0.0
    %658 = vmatprep.subr.mxu0 0.0
    %659 = vmatpush1.msra.mxu0 0.0
    %660 = vmatprep.subr.mxu0 0.0
    %661 = vmatpush1.msra.mxu0 0.0
    %662 = vmatprep.subr.mxu0 0.0
    %663 = vmatpush1.msra.mxu0 0.0
    %664 = vmatprep.subr.mxu0 0.0
    %665 = vmatpush1.msra.mxu0 0.0
    %666 = vmatprep.subr.mxu0 0.0
    %667 = vmatpush1.msra.mxu0 0.0
    %668 = vmatprep.subr.mxu0 0.0
    %669 = vmatpush1.msra.mxu0 0.0
    %670 = vmatprep.subr.mxu0 0.0
    %671 = vmatpush1.msra.mxu0 0.0
    %672 = vmatprep.subr.mxu0 0.0
    %673 = vmatpush1.msra.mxu0 0.0
    %674 = vmatprep.subr.mxu0 0.0
    %675 = vmatpush1.msra.mxu0 0.0
    %676 = vmatprep.subr.mxu0 0.0
    %677 = vmatpush1.msra.mxu0 0.0
    %678 = vmatprep.subr.mxu0 0.0
    %679 = vmatpush1.msra.mxu0 0.0
    %680 = vmatprep.subr.mxu0 0.0
    %681 = vmatpush1.msra.mxu0 0.0
    %682 = vmatprep.subr.mxu0 0.0
    %683 = vmatpush1.msra.mxu0 0.0
    %684 = vmatprep.subr.mxu0 0.0
    %685 = vmatpush1.msra.mxu0 0.0
    %686 = vmatprep.subr.mxu0 0.0
    %687 = vmatpush1.msra.mxu0 0.0
    %688 = vmatprep.subr.mxu0 0.0
    %689 = vmatpush1.msra.mxu0 0.0
    %690 = vmatprep.subr.mxu0 0.0
    %691 = vmatpush1.msra.mxu0 0.0
    %692 = vmatprep.subr.mxu0 0.0
    %693 = vmatpush1.msra.mxu0 0.0
    %694 = vmatprep.subr.mxu0 0.0
    %695 = vmatpush1.msra.mxu0 0.0
    %696 = vmatprep.subr.mxu0 0.0
    %697 = vmatpush1.msra.mxu0 0.0
    %698 = vmatprep.subr.mxu0 0.0
    %699 = vmatpush1.msra.mxu0 0.0
    %700 = vmatprep.subr.mxu0 0.0
    %701 = vmatpush1.msra.mxu0 0.0
    %702 = vmatprep.subr.mxu0 0.0
    %703 = vmatpush1.msra.mxu0 0.0
    %704 = vmatprep.subr.mxu0 0.0
    %705 = vmatpush1.msra.mxu0 0.0
    %706 = vmatprep.mubr.f32.mxu0 0.0
    %707 = vmatmul.mubr.f32.gmra.mrb[0].mxu0 %v640
    %v708 = vpop.f32.mrb[0].mxu0
    %v709 = vadd.f32 0.0, %v708
    %v710 = vpop.f32.mrb[0].mxu0
    %711 = vdwg.mxu0
    %v712 = vadd.f32 %v639, %v709
    %v713 = vxor.u32 %v712, 2147483648
    %v714 = vmul.f32 %v713, 1.442695
    %v715 = vpow.pop %v714
    %v716 = vadd.f32 %v715, 1.0
    %v717 = vrcp.pop %v716
    %v718 = vmul.f32 1.0, %v717
    %v719 = vtanh.pop %v712
    %v720 = vmul.f32 %v718, %v625
    %722 = vrot.lane.b32.xlu0 %v719, 64
    %v723 = vpop.permute.xlu0 %722
    %v725 = vmul.f32 %v718, %v723
    %727 = vrot.lane.b32.xlu0 %v725, 32
    %v728 = vpop.permute.xlu0 %727
    %v730 = vadd.f32 %v720, %v728
    %v731 = vtanh.pop %v730
    %733 = vrot.lane.b32.xlu0 %v731, 64
    %v734 = vpop.permute.xlu0 %733
    %v736 = vmul.f32 %v718, %v734
    %738 = vrot.lane.b32.xlu0 %v736, 32
    %v739 = vpop.permute.xlu0 %738
    %s741 = scalar_lea.vmem [#allocation3], 32
    %742 = vst.msk [vmem:[%s741] sm:$0xff] %vm219, %v739
    %s743 = scalar_lea.vmem [#allocation2], 40
    %v744 = vld [vmem:[%s743] sm:$0xff]
    %v745 = vsel %vm219, %v739, 0
    %747 = vmatprep.subr.mxu0 0.0
    %748 = vmatpush1.msra.mxu0 %v214
    %749 = vmatprep.subr.mxu0 0.0
    %750 = vmatpush1.msra.mxu0 %v215
    %751 = vmatprep.subr.mxu0 0.0
    %752 = vmatpush1.msra.mxu0 %v216
    %753 = vmatprep.subr.mxu0 0.0
    %754 = vmatpush1.msra.mxu0 %v217
    %755 = vmatprep.subr.mxu0 0.0
    %756 = vmatpush1.msra.mxu0 0.0
    %757 = vmatprep.subr.mxu0 0.0
    %758 = vmatpush1.msra.mxu0 0.0
    %759 = vmatprep.subr.mxu0 0.0
    %760 = vmatpush1.msra.mxu0 0.0
    %761 = vmatprep.subr.mxu0 0.0
    %762 = vmatpush1.msra.mxu0 0.0
    %763 = vmatprep.subr.mxu0 0.0
    %764 = vmatpush1.msra.mxu0 0.0
    %765 = vmatprep.subr.mxu0 0.0
    %766 = vmatpush1.msra.mxu0 0.0
    %767 = vmatprep.subr.mxu0 0.0
    %768 = vmatpush1.msra.mxu0 0.0
    %769 = vmatprep.subr.mxu0 0.0
    %770 = vmatpush1.msra.mxu0 0.0
    %771 = vmatprep.subr.mxu0 0.0
    %772 = vmatpush1.msra.mxu0 0.0
    %773 = vmatprep.subr.mxu0 0.0
    %774 = vmatpush1.msra.mxu0 0.0
    %775 = vmatprep.subr.mxu0 0.0
    %776 = vmatpush1.msra.mxu0 0.0
    %777 = vmatprep.subr.mxu0 0.0
    %778 = vmatpush1.msra.mxu0 0.0
    %779 = vmatprep.subr.mxu0 0.0
    %780 = vmatpush1.msra.mxu0 0.0
    %781 = vmatprep.subr.mxu0 0.0
    %782 = vmatpush1.msra.mxu0 0.0
    %783 = vmatprep.subr.mxu0 0.0
    %784 = vmatpush1.msra.mxu0 0.0
    %785 = vmatprep.subr.mxu0 0.0
    %786 = vmatpush1.msra.mxu0 0.0
    %787 = vmatprep.subr.mxu0 0.0
    %788 = vmatpush1.msra.mxu0 0.0
    %789 = vmatprep.subr.mxu0 0.0
    %790 = vmatpush1.msra.mxu0 0.0
    %791 = vmatprep.subr.mxu0 0.0
    %792 = vmatpush1.msra.mxu0 0.0
    %793 = vmatprep.subr.mxu0 0.0
    %794 = vmatpush1.msra.mxu0 0.0
    %795 = vmatprep.subr.mxu0 0.0
    %796 = vmatpush1.msra.mxu0 0.0
    %797 = vmatprep.subr.mxu0 0.0
    %798 = vmatpush1.msra.mxu0 0.0
    %799 = vmatprep.subr.mxu0 0.0
    %800 = vmatpush1.msra.mxu0 0.0
    %801 = vmatprep.subr.mxu0 0.0
    %802 = vmatpush1.msra.mxu0 0.0
    %803 = vmatprep.subr.mxu0 0.0
    %804 = vmatpush1.msra.mxu0 0.0
    %805 = vmatprep.subr.mxu0 0.0
    %806 = vmatpush1.msra.mxu0 0.0
    %807 = vmatprep.subr.mxu0 0.0
    %808 = vmatpush1.msra.mxu0 0.0
    %809 = vmatprep.subr.mxu0 0.0
    %810 = vmatpush1.msra.mxu0 0.0
    %811 = vmatprep.mubr.f32.mxu0 0.0
    %812 = vmatmul.mubr.f32.gmra.mrb[0].mxu0 %v745
    %v813 = vpop.f32.mrb[0].mxu0
    %v814 = vadd.f32 0.0, %v813
    %v815 = vpop.f32.mrb[0].mxu0
    %816 = vdwg.mxu0
    %v817 = vadd.f32 %v744, %v814
    %v818 = vxor.u32 %v817, 2147483648
    %v819 = vmul.f32 %v818, 1.442695
    %v820 = vpow.pop %v819
    %v821 = vadd.f32 %v820, 1.0
    %v822 = vrcp.pop %v821
    %v823 = vmul.f32 1.0, %v822
    %v824 = vtanh.pop %v817
    %v825 = vmul.f32 %v823, %v730
    %827 = vrot.lane.b32.xlu0 %v824, 64
    %v828 = vpop.permute.xlu0 %827
    %v830 = vmul.f32 %v823, %v828
    %832 = vrot.lane.b32.xlu0 %v830, 32
    %v833 = vpop.permute.xlu0 %832
    %v835 = vadd.f32 %v825, %v833
    %v836 = vtanh.pop %v835
    %838 = vrot.lane.b32.xlu0 %v836, 64
    %v839 = vpop.permute.xlu0 %838
    %v841 = vmul.f32 %v823, %v839
    %843 = vrot.lane.b32.xlu0 %v841, 32
    %v844 = vpop.permute.xlu0 %843
    %s846 = scalar_lea.vmem [#allocation3], 40
    %847 = vst.msk [vmem:[%s846] sm:$0xff] %vm219, %v844
    %s848 = scalar_lea.vmem [#allocation2], 48
    %v849 = vld [vmem:[%s848] sm:$0xff]
    %v850 = vsel %vm219, %v844, 0
    %852 = vmatprep.subr.mxu0 0.0
    %853 = vmatpush1.msra.mxu0 %v214
    %854 = vmatprep.subr.mxu0 0.0
    %855 = vmatpush1.msra.mxu0 %v215
    %856 = vmatprep.subr.mxu0 0.0
    %857 = vmatpush1.msra.mxu0 %v216
    %858 = vmatprep.subr.mxu0 0.0
    %859 = vmatpush1.msra.mxu0 %v217
    %860 = vmatprep.subr.mxu0 0.0
    %861 = vmatpush1.msra.mxu0 0.0
    %862 = vmatprep.subr.mxu0 0.0
    %863 = vmatpush1.msra.mxu0 0.0
    %864 = vmatprep.subr.mxu0 0.0
    %865 = vmatpush1.msra.mxu0 0.0
    %866 = vmatprep.subr.mxu0 0.0
    %867 = vmatpush1.msra.mxu0 0.0
    %868 = vmatprep.subr.mxu0 0.0
    %869 = vmatpush1.msra.mxu0 0.0
    %870 = vmatprep.subr.mxu0 0.0
    %871 = vmatpush1.msra.mxu0 0.0
    %872 = vmatprep.subr.mxu0 0.0
    %873 = vmatpush1.msra.mxu0 0.0
    %874 = vmatprep.subr.mxu0 0.0
    %875 = vmatpush1.msra.mxu0 0.0
    %876 = vmatprep.subr.mxu0 0.0
    %877 = vmatpush1.msra.mxu0 0.0
    %878 = vmatprep.subr.mxu0 0.0
    %879 = vmatpush1.msra.mxu0 0.0
    %880 = vmatprep.subr.mxu0 0.0
    %881 = vmatpush1.msra.mxu0 0.0
    %882 = vmatprep.subr.mxu0 0.0
    %883 = vmatpush1.msra.mxu0 0.0
    %884 = vmatprep.subr.mxu0 0.0
    %885 = vmatpush1.msra.mxu0 0.0
    %886 = vmatprep.subr.mxu0 0.0
    %887 = vmatpush1.msra.mxu0 0.0
    %888 = vmatprep.subr.mxu0 0.0
    %889 = vmatpush1.msra.mxu0 0.0
    %890 = vmatprep.subr.mxu0 0.0
    %891 = vmatpush1.msra.mxu0 0.0
    %892 = vmatprep.subr.mxu0 0.0
    %893 = vmatpush1.msra.mxu0 0.0
    %894 = vmatprep.subr.mxu0 0.0
    %895 = vmatpush1.msra.mxu0 0.0
    %896 = vmatprep.subr.mxu0 0.0
    %897 = vmatpush1.msra.mxu0 0.0
    %898 = vmatprep.subr.mxu0 0.0
    %899 = vmatpush1.msra.mxu0 0.0
    %900 = vmatprep.subr.mxu0 0.0
    %901 = vmatpush1.msra.mxu0 0.0
    %902 = vmatprep.subr.mxu0 0.0
    %903 = vmatpush1.msra.mxu0 0.0
    %904 = vmatprep.subr.mxu0 0.0
    %905 = vmatpush1.msra.mxu0 0.0
    %906 = vmatprep.subr.mxu0 0.0
    %907 = vmatpush1.msra.mxu0 0.0
    %908 = vmatprep.subr.mxu0 0.0
    %909 = vmatpush1.msra.mxu0 0.0
    %910 = vmatprep.subr.mxu0 0.0
    %911 = vmatpush1.msra.mxu0 0.0
    %912 = vmatprep.subr.mxu0 0.0
    %913 = vmatpush1.msra.mxu0 0.0
    %914 = vmatprep.subr.mxu0 0.0
    %915 = vmatpush1.msra.mxu0 0.0
    %916 = vmatprep.mubr.f32.mxu0 0.0
    %917 = vmatmul.mubr.f32.gmra.mrb[0].mxu0 %v850
    %v918 = vpop.f32.mrb[0].mxu0
    %v919 = vadd.f32 0.0, %v918
    %v920 = vpop.f32.mrb[0].mxu0
    %921 = vdwg.mxu0
    %v922 = vadd.f32 %v849, %v919
    %v923 = vxor.u32 %v922, 2147483648
    %v924 = vmul.f32 %v923, 1.442695
    %v925 = vpow.pop %v924
    %v926 = vadd.f32 %v925, 1.0
    %v927 = vrcp.pop %v926
    %v928 = vmul.f32 1.0, %v927
    %v929 = vtanh.pop %v922
    %v930 = vmul.f32 %v928, %v835
    %932 = vrot.lane.b32.xlu0 %v929, 64
    %v933 = vpop.permute.xlu0 %932
    %v935 = vmul.f32 %v928, %v933
    %937 = vrot.lane.b32.xlu0 %v935, 32
    %v938 = vpop.permute.xlu0 %937
    %v940 = vadd.f32 %v930, %v938
    %v941 = vtanh.pop %v940
    %943 = vrot.lane.b32.xlu0 %v941, 64
    %v944 = vpop.permute.xlu0 %943
    %v946 = vmul.f32 %v928, %v944
    %948 = vrot.lane.b32.xlu0 %v946, 32
    %v949 = vpop.permute.xlu0 %948
    %s951 = scalar_lea.vmem [#allocation3], 48
    %952 = vst.msk [vmem:[%s951] sm:$0xff] %vm219, %v949
    %s953 = scalar_lea.vmem [#allocation2], 56
    %v954 = vld [vmem:[%s953] sm:$0xff]
    %v955 = vsel %vm219, %v949, 0
    %957 = vmatprep.subr.mxu0 0.0
    %958 = vmatpush1.msra.mxu0 %v214
    %959 = vmatprep.subr.mxu0 0.0
    %960 = vmatpush1.msra.mxu0 %v215
    %961 = vmatprep.subr.mxu0 0.0
    %962 = vmatpush1.msra.mxu0 %v216
    %963 = vmatprep.subr.mxu0 0.0
    %964 = vmatpush1.msra.mxu0 %v217
    %965 = vmatprep.subr.mxu0 0.0
    %966 = vmatpush1.msra.mxu0 0.0
    %967 = vmatprep.subr.mxu0 0.0
    %968 = vmatpush1.msra.mxu0 0.0
    %969 = vmatprep.subr.mxu0 0.0
    %970 = vmatpush1.msra.mxu0 0.0
    %971 = vmatprep.subr.mxu0 0.0
    %972 = vmatpush1.msra.mxu0 0.0
    %973 = vmatprep.subr.mxu0 0.0
    %974 = vmatpush1.msra.mxu0 0.0
    %975 = vmatprep.subr.mxu0 0.0
    %976 = vmatpush1.msra.mxu0 0.0
    %977 = vmatprep.subr.mxu0 0.0
    %978 = vmatpush1.msra.mxu0 0.0
    %979 = vmatprep.subr.mxu0 0.0
    %980 = vmatpush1.msra.mxu0 0.0
    %981 = vmatprep.subr.mxu0 0.0
    %982 = vmatpush1.msra.mxu0 0.0
    %983 = vmatprep.subr.mxu0 0.0
    %984 = vmatpush1.msra.mxu0 0.0
    %985 = vmatprep.subr.mxu0 0.0
    %986 = vmatpush1.msra.mxu0 0.0
    %987 = vmatprep.subr.mxu0 0.0
    %988 = vmatpush1.msra.mxu0 0.0
    %989 = vmatprep.subr.mxu0 0.0
    %990 = vmatpush1.msra.mxu0 0.0
    %991 = vmatprep.subr.mxu0 0.0
    %992 = vmatpush1.msra.mxu0 0.0
    %993 = vmatprep.subr.mxu0 0.0
    %994 = vmatpush1.msra.mxu0 0.0
    %995 = vmatprep.subr.mxu0 0.0
    %996 = vmatpush1.msra.mxu0 0.0
    %997 = vmatprep.subr.mxu0 0.0
    %998 = vmatpush1.msra.mxu0 0.0
    %999 = vmatprep.subr.mxu0 0.0
    %1000 = vmatpush1.msra.mxu0 0.0
    %1001 = vmatprep.subr.mxu0 0.0
    %1002 = vmatpush1.msra.mxu0 0.0
    %1003 = vmatprep.subr.mxu0 0.0
    %1004 = vmatpush1.msra.mxu0 0.0
    %1005 = vmatprep.subr.mxu0 0.0
    %1006 = vmatpush1.msra.mxu0 0.0
    %1007 = vmatprep.subr.mxu0 0.0
    %1008 = vmatpush1.msra.mxu0 0.0
    %1009 = vmatprep.subr.mxu0 0.0
    %1010 = vmatpush1.msra.mxu0 0.0
    %1011 = vmatprep.subr.mxu0 0.0
    %1012 = vmatpush1.msra.mxu0 0.0
    %1013 = vmatprep.subr.mxu0 0.0
    %1014 = vmatpush1.msra.mxu0 0.0
    %1015 = vmatprep.subr.mxu0 0.0
    %1016 = vmatpush1.msra.mxu0 0.0
    %1017 = vmatprep.subr.mxu0 0.0
    %1018 = vmatpush1.msra.mxu0 0.0
    %1019 = vmatprep.subr.mxu0 0.0
    %1020 = vmatpush1.msra.mxu0 0.0
    %1021 = vmatprep.mubr.f32.mxu0 0.0
    %1022 = vmatmul.mubr.f32.gmra.mrb[0].mxu0 %v955
    %v1023 = vpop.f32.mrb[0].mxu0
    %v1024 = vadd.f32 0.0, %v1023
    %v1025 = vpop.f32.mrb[0].mxu0
    %1026 = vdwg.mxu0
    %v1027 = vadd.f32 %v954, %v1024
    %v1028 = vxor.u32 %v1027, 2147483648
    %v1029 = vmul.f32 %v1028, 1.442695
    %v1030 = vpow.pop %v1029
    %v1031 = vadd.f32 %v1030, 1.0
    %v1032 = vrcp.pop %v1031
    %v1033 = vmul.f32 1.0, %v1032
    %v1034 = vtanh.pop %v1027
    %v1035 = vmul.f32 %v1033, %v940
    %1037 = vrot.lane.b32.xlu0 %v1034, 64
    %v1038 = vpop.permute.xlu0 %1037
    %v1040 = vmul.f32 %v1033, %v1038
    %1042 = vrot.lane.b32.xlu0 %v1040, 32
    %v1043 = vpop.permute.xlu0 %1042
    %v1045 = vadd.f32 %v1035, %v1043
    %v1046 = vtanh.pop %v1045
    %1048 = vrot.lane.b32.xlu0 %v1046, 64
    %v1049 = vpop.permute.xlu0 %1048
    %v1051 = vmul.f32 %v1033, %v1049
    %1053 = vrot.lane.b32.xlu0 %v1051, 32
    %v1054 = vpop.permute.xlu0 %1053
    %s1056 = scalar_lea.vmem [#allocation3], 56
    %1057 = vst.msk [vmem:[%s1056] sm:$0xff] %vm219, %v1054
    %v1058 = vld [vmem:[%s5] sm:$0xff]
    %v1059 = vld [vmem:[%s5 + $0x8] sm:$0xff]
    %v1060 = vld [vmem:[%s5 + $0x10] sm:$0xff]
    %v1061 = vld [vmem:[%s5 + $0x18] sm:$0xff]
    %v1062 = vld [vmem:[%s6] sm:$0x1]
    %v1064 = vlaneseq
    %v1065 = vshrl.u32 %v1064, 7
    %v1066 = vsub.s32 0, %v1065
    %v1067 = vrot.slane %v1062, %v1066
    %v1069 = vsel %vm219, %v1054, 0
    %1071 = vmatprep.subr.mxu0 0.0
    %1072 = vmatpush1.msra.mxu0 %v1058
    %1073 = vmatprep.subr.mxu0 0.0
    %1074 = vmatpush1.msra.mxu0 %v1059
    %1075 = vmatprep.subr.mxu0 0.0
    %1076 = vmatpush1.msra.mxu0 %v1060
    %1077 = vmatprep.subr.mxu0 0.0
    %1078 = vmatpush1.msra.mxu0 %v1061
    %1079 = vmatprep.subr.mxu0 0.0
    %1080 = vmatpush1.msra.mxu0 0.0
    %1081 = vmatprep.subr.mxu0 0.0
    %1082 = vmatpush1.msra.mxu0 0.0
    %1083 = vmatprep.subr.mxu0 0.0
    %1084 = vmatpush1.msra.mxu0 0.0
    %1085 = vmatprep.subr.mxu0 0.0
    %1086 = vmatpush1.msra.mxu0 0.0
    %1087 = vmatprep.subr.mxu0 0.0
    %1088 = vmatpush1.msra.mxu0 0.0
    %1089 = vmatprep.subr.mxu0 0.0
    %1090 = vmatpush1.msra.mxu0 0.0
    %1091 = vmatprep.subr.mxu0 0.0
    %1092 = vmatpush1.msra.mxu0 0.0
    %1093 = vmatprep.subr.mxu0 0.0
    %1094 = vmatpush1.msra.mxu0 0.0
    %1095 = vmatprep.subr.mxu0 0.0
    %1096 = vmatpush1.msra.mxu0 0.0
    %1097 = vmatprep.subr.mxu0 0.0
    %1098 = vmatpush1.msra.mxu0 0.0
    %1099 = vmatprep.subr.mxu0 0.0
    %1100 = vmatpush1.msra.mxu0 0.0
    %1101 = vmatprep.subr.mxu0 0.0
    %1102 = vmatpush1.msra.mxu0 0.0
    %1103 = vmatprep.subr.mxu0 0.0
    %1104 = vmatpush1.msra.mxu0 0.0
    %1105 = vmatprep.subr.mxu0 0.0
    %1106 = vmatpush1.msra.mxu0 0.0
    %1107 = vmatprep.subr.mxu0 0.0
    %1108 = vmatpush1.msra.mxu0 0.0
    %1109 = vmatprep.subr.mxu0 0.0
    %1110 = vmatpush1.msra.mxu0 0.0
    %1111 = vmatprep.subr.mxu0 0.0
    %1112 = vmatpush1.msra.mxu0 0.0
    %1113 = vmatprep.subr.mxu0 0.0
    %1114 = vmatpush1.msra.mxu0 0.0
    %1115 = vmatprep.subr.mxu0 0.0
    %1116 = vmatpush1.msra.mxu0 0.0
    %1117 = vmatprep.subr.mxu0 0.0
    %1118 = vmatpush1.msra.mxu0 0.0
    %1119 = vmatprep.subr.mxu0 0.0
    %1120 = vmatpush1.msra.mxu0 0.0
    %1121 = vmatprep.subr.mxu0 0.0
    %1122 = vmatpush1.msra.mxu0 0.0
    %1123 = vmatprep.subr.mxu0 0.0
    %1124 = vmatpush1.msra.mxu0 0.0
    %1125 = vmatprep.subr.mxu0 0.0
    %1126 = vmatpush1.msra.mxu0 0.0
    %1127 = vmatprep.subr.mxu0 0.0
    %1128 = vmatpush1.msra.mxu0 0.0
    %1129 = vmatprep.subr.mxu0 0.0
    %1130 = vmatpush1.msra.mxu0 0.0
    %1131 = vmatprep.subr.mxu0 0.0
    %1132 = vmatpush1.msra.mxu0 0.0
    %1133 = vmatprep.subr.mxu0 0.0
    %1134 = vmatpush1.msra.mxu0 0.0
    %1135 = vmatprep.mubr.f32.mxu0 0.0
    %1136 = vmatmul.mubr.f32.gmra.mrb[0].mxu0 %v1069
    %v1137 = vpop.f32.mrb[0].mxu0
    %v1138 = vadd.f32 %v1067, %v1137
    %v1139 = vpop.f32.mrb[0].mxu0
    %1140 = vdwg.mxu0
    %1141 = vst [vmem:[#allocation9] sm:$0xff] %v1138
    %v1142 = vld [vmem:[#allocation3] sm:$0xff]
    %v1143 = vld [vmem:[#allocation3 + $0x8] sm:$0xff]
    %v1144 = vld [vmem:[#allocation3 + $0x10] sm:$0xff]
    %v1145 = vld [vmem:[#allocation3 + $0x18] sm:$0xff]
    %v1146 = vld [vmem:[#allocation3 + $0x20] sm:$0xff]
    %v1147 = vld [vmem:[#allocation3 + $0x28] sm:$0xff]
    %v1148 = vld [vmem:[#allocation3 + $0x30] sm:$0xff]
    %v1149 = vld [vmem:[#allocation3 + $0x38] sm:$0xff]
    %v1150 = vld [vmem:[#allocation7] sm:$0xff]
    %v1151 = vld [vmem:[#allocation7 + $0x8] sm:$0xff]
    %v1152 = vld [vmem:[#allocation7 + $0x10] sm:$0xff]
    %v1153 = vld [vmem:[#allocation7 + $0x18] sm:$0xff]
    %s1154 = scalar_lea.vmem %s4, 1
    %v1155 = vld [vmem:[%s1154] sm:$0x1]
    %v1157 = vlaneseq
    %v1158 = vshrl.u32 %v1157, 7
    %v1159 = vsub.s32 0, %v1158
    %v1160 = vrot.slane %v1155, %v1159
    %v1163 = vsel %vm219, %v1142, 0
    %v1166 = vsel %vm219, %v1143, 0
    %v1169 = vsel %vm219, %v1144, 0
    %v1172 = vsel %vm219, %v1145, 0
    %v1175 = vsel %vm219, %v1146, 0
    %v1178 = vsel %vm219, %v1147, 0
    %v1181 = vsel %vm219, %v1148, 0
    %v1184 = vsel %vm219, %v1149, 0
    %1186 = vmatprep.subr.mxu0 0.0
    %1187 = vmatpush1.msra.mxu0 %v1150
    %1188 = vmatprep.subr.mxu0 0.0
    %1189 = vmatpush1.msra.mxu0 %v1151
    %1190 = vmatprep.subr.mxu0 0.0
    %1191 = vmatpush1.msra.mxu0 %v1152
    %1192 = vmatprep.subr.mxu0 0.0
    %1193 = vmatpush1.msra.mxu0 %v1153
    %1194 = vmatprep.subr.mxu0 0.0
    %1195 = vmatpush1.msra.mxu0 0.0
    %1196 = vmatprep.subr.mxu0 0.0
    %1197 = vmatpush1.msra.mxu0 0.0
    %1198 = vmatprep.subr.mxu0 0.0
    %1199 = vmatpush1.msra.mxu0 0.0
    %1200 = vmatprep.subr.mxu0 0.0
    %1201 = vmatpush1.msra.mxu0 0.0
    %1202 = vmatprep.subr.mxu0 0.0
    %1203 = vmatpush1.msra.mxu0 0.0
    %1204 = vmatprep.subr.mxu0 0.0
    %1205 = vmatpush1.msra.mxu0 0.0
    %1206 = vmatprep.subr.mxu0 0.0
    %1207 = vmatpush1.msra.mxu0 0.0
    %1208 = vmatprep.subr.mxu0 0.0
    %1209 = vmatpush1.msra.mxu0 0.0
    %1210 = vmatprep.subr.mxu0 0.0
    %1211 = vmatpush1.msra.mxu0 0.0
    %1212 = vmatprep.subr.mxu0 0.0
    %1213 = vmatpush1.msra.mxu0 0.0
    %1214 = vmatprep.subr.mxu0 0.0
    %1215 = vmatpush1.msra.mxu0 0.0
    %1216 = vmatprep.subr.mxu0 0.0
    %1217 = vmatpush1.msra.mxu0 0.0
    %1218 = vmatprep.subr.mxu0 0.0
    %1219 = vmatpush1.msra.mxu0 0.0
    %1220 = vmatprep.subr.mxu0 0.0
    %1221 = vmatpush1.msra.mxu0 0.0
    %1222 = vmatprep.subr.mxu0 0.0
    %1223 = vmatpush1.msra.mxu0 0.0
    %1224 = vmatprep.subr.mxu0 0.0
    %1225 = vmatpush1.msra.mxu0 0.0
    %1226 = vmatprep.subr.mxu0 0.0
    %1227 = vmatpush1.msra.mxu0 0.0
    %1228 = vmatprep.subr.mxu0 0.0
    %1229 = vmatpush1.msra.mxu0 0.0
    %1230 = vmatprep.subr.mxu0 0.0
    %1231 = vmatpush1.msra.mxu0 0.0
    %1232 = vmatprep.subr.mxu0 0.0
    %1233 = vmatpush1.msra.mxu0 0.0
    %1234 = vmatprep.subr.mxu0 0.0
    %1235 = vmatpush1.msra.mxu0 0.0
    %1236 = vmatprep.subr.mxu0 0.0
    %1237 = vmatpush1.msra.mxu0 0.0
    %1238 = vmatprep.subr.mxu0 0.0
    %1239 = vmatpush1.msra.mxu0 0.0
    %1240 = vmatprep.subr.mxu0 0.0
    %1241 = vmatpush1.msra.mxu0 0.0
    %1242 = vmatprep.subr.mxu0 0.0
    %1243 = vmatpush1.msra.mxu0 0.0
    %1244 = vmatprep.subr.mxu0 0.0
    %1245 = vmatpush1.msra.mxu0 0.0
    %1246 = vmatprep.subr.mxu0 0.0
    %1247 = vmatpush1.msra.mxu0 0.0
    %1248 = vmatprep.subr.mxu0 0.0
    %1249 = vmatpush1.msra.mxu0 0.0
    %1250 = vmatprep.mubr.f32.mxu0 0.0
    %1251 = vmatmul.mubr.f32.gmra.mrb[0].mxu0 %v1163
    %v1252 = vpop.f32.mrb[0].mxu0
    %v1253 = vadd.f32 %v1160, %v1252
    %v1254 = vpop.f32.mrb[0].mxu0
    %1255 = vmatprep.mubr.f32.mxu0 0.0
    %1256 = vmatmul.mubr.f32.gmra.mrb[0].mxu0 %v1166
    %v1257 = vpop.f32.mrb[0].mxu0
    %v1258 = vadd.f32 %v1160, %v1257
    %v1259 = vpop.f32.mrb[0].mxu0
    %1260 = vmatprep.mubr.f32.mxu0 0.0
    %1261 = vmatmul.mubr.f32.gmra.mrb[0].mxu0 %v1169
    %v1262 = vpop.f32.mrb[0].mxu0
    %v1263 = vadd.f32 %v1160, %v1262
    %v1264 = vpop.f32.mrb[0].mxu0
    %1265 = vmatprep.mubr.f32.mxu0 0.0
    %1266 = vmatmul.mubr.f32.gmra.mrb[0].mxu0 %v1172
    %v1267 = vpop.f32.mrb[0].mxu0
    %v1268 = vadd.f32 %v1160, %v1267
    %v1269 = vpop.f32.mrb[0].mxu0
    %1270 = vmatprep.mubr.f32.mxu0 0.0
    %1271 = vmatmul.mubr.f32.gmra.mrb[0].mxu0 %v1175
    %v1272 = vpop.f32.mrb[0].mxu0
    %v1273 = vadd.f32 %v1160, %v1272
    %v1274 = vpop.f32.mrb[0].mxu0
    %1275 = vmatprep.mubr.f32.mxu0 0.0
    %1276 = vmatmul.mubr.f32.gmra.mrb[0].mxu0 %v1178
    %v1277 = vpop.f32.mrb[0].mxu0
    %v1278 = vadd.f32 %v1160, %v1277
    %v1279 = vpop.f32.mrb[0].mxu0
    %1280 = vmatprep.mubr.f32.mxu0 0.0
    %1281 = vmatmul.mubr.f32.gmra.mrb[0].mxu0 %v1181
    %v1282 = vpop.f32.mrb[0].mxu0
    %v1283 = vadd.f32 %v1160, %v1282
    %v1284 = vpop.f32.mrb[0].mxu0
    %1285 = vmatprep.mubr.f32.mxu0 0.0
    %1286 = vmatmul.mubr.f32.gmra.mrb[0].mxu0 %v1184
    %v1287 = vpop.f32.mrb[0].mxu0
    %v1288 = vadd.f32 %v1160, %v1287
    %v1289 = vpop.f32.mrb[0].mxu0
    %1290 = vdwg.mxu0
    %1291 = vst [vmem:[#allocation2] sm:$0xff] %v1253
    %1292 = vst [vmem:[#allocation2 + $0x8] sm:$0xff] %v1258
    %1293 = vst [vmem:[#allocation2 + $0x10] sm:$0xff] %v1263
    %1294 = vst [vmem:[#allocation2 + $0x18] sm:$0xff] %v1268
    %1295 = vst [vmem:[#allocation2 + $0x20] sm:$0xff] %v1273
    %1296 = vst [vmem:[#allocation2 + $0x28] sm:$0xff] %v1278
    %1297 = vst [vmem:[#allocation2 + $0x30] sm:$0xff] %v1283
    %1298 = vst [vmem:[#allocation2 + $0x38] sm:$0xff] %v1288
    %s1299 = scalar_lea.vmem %s3, 32
    %v1300 = vld [vmem:[%s1299] sm:$0xff]
    %v1301 = vld [vmem:[%s1299 + $0x8] sm:$0xff]
    %v1302 = vld [vmem:[%s1299 + $0x10] sm:$0xff]
    %v1303 = vld [vmem:[%s1299 + $0x18] sm:$0xff]
    %v1304 = vld [vmem:[#allocation2] sm:$0xff]
    %1305 = vmatprep.subr.mxu0 0.0
    %1306 = vmatpush1.msra.mxu0 %v1300
    %1307 = vmatprep.subr.mxu0 0.0
    %1308 = vmatpush1.msra.mxu0 %v1301
    %1309 = vmatprep.subr.mxu0 0.0
    %1310 = vmatpush1.msra.mxu0 %v1302
    %1311 = vmatprep.subr.mxu0 0.0
    %1312 = vmatpush1.msra.mxu0 %v1303
    %1313 = vmatprep.subr.mxu0 0.0
    %1314 = vmatpush1.msra.mxu0 0.0
    %1315 = vmatprep.subr.mxu0 0.0
    %1316 = vmatpush1.msra.mxu0 0.0
    %1317 = vmatprep.subr.mxu0 0.0
    %1318 = vmatpush1.msra.mxu0 0.0
    %1319 = vmatprep.subr.mxu0 0.0
    %1320 = vmatpush1.msra.mxu0 0.0
    %1321 = vmatprep.subr.mxu0 0.0
    %1322 = vmatpush1.msra.mxu0 0.0
    %1323 = vmatprep.subr.mxu0 0.0
    %1324 = vmatpush1.msra.mxu0 0.0
    %1325 = vmatprep.subr.mxu0 0.0
    %1326 = vmatpush1.msra.mxu0 0.0
    %1327 = vmatprep.subr.mxu0 0.0
    %1328 = vmatpush1.msra.mxu0 0.0
    %1329 = vmatprep.subr.mxu0 0.0
    %1330 = vmatpush1.msra.mxu0 0.0
    %1331 = vmatprep.subr.mxu0 0.0
    %1332 = vmatpush1.msra.mxu0 0.0
    %1333 = vmatprep.subr.mxu0 0.0
    %1334 = vmatpush1.msra.mxu0 0.0
    %1335 = vmatprep.subr.mxu0 0.0
    %1336 = vmatpush1.msra.mxu0 0.0
    %1337 = vmatprep.subr.mxu0 0.0
    %1338 = vmatpush1.msra.mxu0 0.0
    %1339 = vmatprep.subr.mxu0 0.0
    %1340 = vmatpush1.msra.mxu0 0.0
    %1341 = vmatprep.subr.mxu0 0.0
    %1342 = vmatpush1.msra.mxu0 0.0
    %1343 = vmatprep.subr.mxu0 0.0
    %1344 = vmatpush1.msra.mxu0 0.0
    %1345 = vmatprep.subr.mxu0 0.0
    %1346 = vmatpush1.msra.mxu0 0.0
    %1347 = vmatprep.subr.mxu0 0.0
    %1348 = vmatpush1.msra.mxu0 0.0
    %1349 = vmatprep.subr.mxu0 0.0
    %1350 = vmatpush1.msra.mxu0 0.0
    %1351 = vmatprep.subr.mxu0 0.0
    %1352 = vmatpush1.msra.mxu0 0.0
    %1353 = vmatprep.subr.mxu0 0.0
    %1354 = vmatpush1.msra.mxu0 0.0
    %1355 = vmatprep.subr.mxu0 0.0
    %1356 = vmatpush1.msra.mxu0 0.0
    %1357 = vmatprep.subr.mxu0 0.0
    %1358 = vmatpush1.msra.mxu0 0.0
    %1359 = vmatprep.subr.mxu0 0.0
    %1360 = vmatpush1.msra.mxu0 0.0
    %1361 = vmatprep.subr.mxu0 0.0
    %1362 = vmatpush1.msra.mxu0 0.0
    %1363 = vmatprep.subr.mxu0 0.0
    %1364 = vmatpush1.msra.mxu0 0.0
    %1365 = vmatprep.subr.mxu0 0.0
    %1366 = vmatpush1.msra.mxu0 0.0
    %1367 = vmatprep.subr.mxu0 0.0
    %1368 = vmatpush1.msra.mxu0 0.0
    %1369 = vmatprep.mubr.f32.mxu0 0.0
    %1370 = vmatmul.mubr.f32.gmra.mrb[0].mxu0 %v221
    %v1371 = vpop.f32.mrb[0].mxu0
    %v1372 = vadd.f32 0.0, %v1371
    %v1373 = vpop.f32.mrb[0].mxu0
    %1374 = vdwg.mxu0
    %v1375 = vadd.f32 %v1304, %v1372
    %v1376 = vxor.u32 %v1375, 2147483648
    %v1377 = vmul.f32 %v1376, 1.442695
    %v1378 = vpow.pop %v1377
    %v1379 = vadd.f32 %v1378, 1.0
    %v1380 = vrcp.pop %v1379
    %v1381 = vmul.f32 1.0, %v1380
    %v1382 = vtanh.pop %v1375
    %v1383 = vmul.f32 %v1381, 0.0
    %1385 = vrot.lane.b32.xlu0 %v1382, 64
    %v1386 = vpop.permute.xlu0 %1385
    %v1388 = vmul.f32 %v1381, %v1386
    %1390 = vrot.lane.b32.xlu0 %v1388, 32
    %v1391 = vpop.permute.xlu0 %1390
    %v1393 = vadd.f32 %v1383, %v1391
    %v1394 = vtanh.pop %v1393
    %1396 = vrot.lane.b32.xlu0 %v1394, 64
    %v1397 = vpop.permute.xlu0 %1396
    %v1399 = vmul.f32 %v1381, %v1397
    %v1400 = vld [vmem:[%s323] sm:$0xff]
    %1402 = vrot.lane.b32.xlu0 %v1399, 32
    %v1403 = vpop.permute.xlu0 %1402
    %v1404 = vsel %vm219, %v1403, 0
    %1406 = vmatprep.subr.mxu0 0.0
    %1407 = vmatpush1.msra.mxu0 %v1300
    %1408 = vmatprep.subr.mxu0 0.0
    %1409 = vmatpush1.msra.mxu0 %v1301
    %1410 = vmatprep.subr.mxu0 0.0
    %1411 = vmatpush1.msra.mxu0 %v1302
    %1412 = vmatprep.subr.mxu0 0.0
    %1413 = vmatpush1.msra.mxu0 %v1303
    %1414 = vmatprep.subr.mxu0 0.0
    %1415 = vmatpush1.msra.mxu0 0.0
    %1416 = vmatprep.subr.mxu0 0.0
    %1417 = vmatpush1.msra.mxu0 0.0
    %1418 = vmatprep.subr.mxu0 0.0
    %1419 = vmatpush1.msra.mxu0 0.0
    %1420 = vmatprep.subr.mxu0 0.0
    %1421 = vmatpush1.msra.mxu0 0.0
    %1422 = vmatprep.subr.mxu0 0.0
    %1423 = vmatpush1.msra.mxu0 0.0
    %1424 = vmatprep.subr.mxu0 0.0
    %1425 = vmatpush1.msra.mxu0 0.0
    %1426 = vmatprep.subr.mxu0 0.0
    %1427 = vmatpush1.msra.mxu0 0.0
    %1428 = vmatprep.subr.mxu0 0.0
    %1429 = vmatpush1.msra.mxu0 0.0
    %1430 = vmatprep.subr.mxu0 0.0
    %1431 = vmatpush1.msra.mxu0 0.0
    %1432 = vmatprep.subr.mxu0 0.0
    %1433 = vmatpush1.msra.mxu0 0.0
    %1434 = vmatprep.subr.mxu0 0.0
    %1435 = vmatpush1.msra.mxu0 0.0
    %1436 = vmatprep.subr.mxu0 0.0
    %1437 = vmatpush1.msra.mxu0 0.0
    %1438 = vmatprep.subr.mxu0 0.0
    %1439 = vmatpush1.msra.mxu0 0.0
    %1440 = vmatprep.subr.mxu0 0.0
    %1441 = vmatpush1.msra.mxu0 0.0
    %1442 = vmatprep.subr.mxu0 0.0
    %1443 = vmatpush1.msra.mxu0 0.0
    %1444 = vmatprep.subr.mxu0 0.0
    %1445 = vmatpush1.msra.mxu0 0.0
    %1446 = vmatprep.subr.mxu0 0.0
    %1447 = vmatpush1.msra.mxu0 0.0
    %1448 = vmatprep.subr.mxu0 0.0
    %1449 = vmatpush1.msra.mxu0 0.0
    %1450 = vmatprep.subr.mxu0 0.0
    %1451 = vmatpush1.msra.mxu0 0.0
    %1452 = vmatprep.subr.mxu0 0.0
    %1453 = vmatpush1.msra.mxu0 0.0
    %1454 = vmatprep.subr.mxu0 0.0
    %1455 = vmatpush1.msra.mxu0 0.0
    %1456 = vmatprep.subr.mxu0 0.0
    %1457 = vmatpush1.msra.mxu0 0.0
    %1458 = vmatprep.subr.mxu0 0.0
    %1459 = vmatpush1.msra.mxu0 0.0
    %1460 = vmatprep.subr.mxu0 0.0
    %1461 = vmatpush1.msra.mxu0 0.0
    %1462 = vmatprep.subr.mxu0 0.0
    %1463 = vmatpush1.msra.mxu0 0.0
    %1464 = vmatprep.subr.mxu0 0.0
    %1465 = vmatpush1.msra.mxu0 0.0
    %1466 = vmatprep.subr.mxu0 0.0
    %1467 = vmatpush1.msra.mxu0 0.0
    %1468 = vmatprep.subr.mxu0 0.0
    %1469 = vmatpush1.msra.mxu0 0.0
    %1470 = vmatprep.mubr.f32.mxu0 0.0
    %1471 = vmatmul.mubr.f32.gmra.mrb[0].mxu0 %v1404
    %v1472 = vpop.f32.mrb[0].mxu0
    %v1473 = vadd.f32 0.0, %v1472
    %v1474 = vpop.f32.mrb[0].mxu0
    %1475 = vdwg.mxu0
    %v1476 = vadd.f32 %v1400, %v1473
    %v1477 = vxor.u32 %v1476, 2147483648
    %v1478 = vmul.f32 %v1477, 1.442695
    %v1479 = vpow.pop %v1478
    %v1480 = vadd.f32 %v1479, 1.0
    %v1481 = vrcp.pop %v1480
    %v1482 = vmul.f32 1.0, %v1481
    %v1483 = vtanh.pop %v1476
    %v1484 = vmul.f32 %v1482, %v1393
    %1486 = vrot.lane.b32.xlu0 %v1483, 64
    %v1487 = vpop.permute.xlu0 %1486
    %v1489 = vmul.f32 %v1482, %v1487
    %1491 = vrot.lane.b32.xlu0 %v1489, 32
    %v1492 = vpop.permute.xlu0 %1491
    %v1494 = vadd.f32 %v1484, %v1492
    %v1495 = vtanh.pop %v1494
    %1497 = vrot.lane.b32.xlu0 %v1495, 64
    %v1498 = vpop.permute.xlu0 %1497
    %v1500 = vmul.f32 %v1482, %v1498
    %v1501 = vld [vmem:[%s428] sm:$0xff]
    %1503 = vrot.lane.b32.xlu0 %v1500, 32
    %v1504 = vpop.permute.xlu0 %1503
    %v1505 = vsel %vm219, %v1504, 0
    %1507 = vmatprep.subr.mxu0 0.0
    %1508 = vmatpush1.msra.mxu0 %v1300
    %1509 = vmatprep.subr.mxu0 0.0
    %1510 = vmatpush1.msra.mxu0 %v1301
    %1511 = vmatprep.subr.mxu0 0.0
    %1512 = vmatpush1.msra.mxu0 %v1302
    %1513 = vmatprep.subr.mxu0 0.0
    %1514 = vmatpush1.msra.mxu0 %v1303
    %1515 = vmatprep.subr.mxu0 0.0
    %1516 = vmatpush1.msra.mxu0 0.0
    %1517 = vmatprep.subr.mxu0 0.0
    %1518 = vmatpush1.msra.mxu0 0.0
    %1519 = vmatprep.subr.mxu0 0.0
    %1520 = vmatpush1.msra.mxu0 0.0
    %1521 = vmatprep.subr.mxu0 0.0
    %1522 = vmatpush1.msra.mxu0 0.0
    %1523 = vmatprep.subr.mxu0 0.0
    %1524 = vmatpush1.msra.mxu0 0.0
    %1525 = vmatprep.subr.mxu0 0.0
    %1526 = vmatpush1.msra.mxu0 0.0
    %1527 = vmatprep.subr.mxu0 0.0
    %1528 = vmatpush1.msra.mxu0 0.0
    %1529 = vmatprep.subr.mxu0 0.0
    %1530 = vmatpush1.msra.mxu0 0.0
    %1531 = vmatprep.subr.mxu0 0.0
    %1532 = vmatpush1.msra.mxu0 0.0
    %1533 = vmatprep.subr.mxu0 0.0
    %1534 = vmatpush1.msra.mxu0 0.0
    %1535 = vmatprep.subr.mxu0 0.0
    %1536 = vmatpush1.msra.mxu0 0.0
    %1537 = vmatprep.subr.mxu0 0.0
    %1538 = vmatpush1.msra.mxu0 0.0
    %1539 = vmatprep.subr.mxu0 0.0
    %1540 = vmatpush1.msra.mxu0 0.0
    %1541 = vmatprep.subr.mxu0 0.0
    %1542 = vmatpush1.msra.mxu0 0.0
    %1543 = vmatprep.subr.mxu0 0.0
    %1544 = vmatpush1.msra.mxu0 0.0
    %1545 = vmatprep.subr.mxu0 0.0
    %1546 = vmatpush1.msra.mxu0 0.0
    %1547 = vmatprep.subr.mxu0 0.0
    %1548 = vmatpush1.msra.mxu0 0.0
    %1549 = vmatprep.subr.mxu0 0.0
    %1550 = vmatpush1.msra.mxu0 0.0
    %1551 = vmatprep.subr.mxu0 0.0
    %1552 = vmatpush1.msra.mxu0 0.0
    %1553 = vmatprep.subr.mxu0 0.0
    %1554 = vmatpush1.msra.mxu0 0.0
    %1555 = vmatprep.subr.mxu0 0.0
    %1556 = vmatpush1.msra.mxu0 0.0
    %1557 = vmatprep.subr.mxu0 0.0
    %1558 = vmatpush1.msra.mxu0 0.0
    %1559 = vmatprep.subr.mxu0 0.0
    %1560 = vmatpush1.msra.mxu0 0.0
    %1561 = vmatprep.subr.mxu0 0.0
    %1562 = vmatpush1.msra.mxu0 0.0
    %1563 = vmatprep.subr.mxu0 0.0
    %1564 = vmatpush1.msra.mxu0 0.0
    %1565 = vmatprep.subr.mxu0 0.0
    %1566 = vmatpush1.msra.mxu0 0.0
    %1567 = vmatprep.subr.mxu0 0.0
    %1568 = vmatpush1.msra.mxu0 0.0
    %1569 = vmatprep.subr.mxu0 0.0
    %1570 = vmatpush1.msra.mxu0 0.0
    %1571 = vmatprep.mubr.f32.mxu0 0.0
    %1572 = vmatmul.mubr.f32.gmra.mrb[0].mxu0 %v1505
    %v1573 = vpop.f32.mrb[0].mxu0
    %v1574 = vadd.f32 0.0, %v1573
    %v1575 = vpop.f32.mrb[0].mxu0
    %1576 = vdwg.mxu0
    %v1577 = vadd.f32 %v1501, %v1574
    %v1578 = vxor.u32 %v1577, 2147483648
    %v1579 = vmul.f32 %v1578, 1.442695
    %v1580 = vpow.pop %v1579
    %v1581 = vadd.f32 %v1580, 1.0
    %v1582 = vrcp.pop %v1581
    %v1583 = vmul.f32 1.0, %v1582
    %v1584 = vtanh.pop %v1577
    %v1585 = vmul.f32 %v1583, %v1494
    %1587 = vrot.lane.b32.xlu0 %v1584, 64
    %v1588 = vpop.permute.xlu0 %1587
    %v1590 = vmul.f32 %v1583, %v1588
    %1592 = vrot.lane.b32.xlu0 %v1590, 32
    %v1593 = vpop.permute.xlu0 %1592
    %v1595 = vadd.f32 %v1585, %v1593
    %v1596 = vtanh.pop %v1595
    %1598 = vrot.lane.b32.xlu0 %v1596, 64
    %v1599 = vpop.permute.xlu0 %1598
    %v1601 = vmul.f32 %v1583, %v1599
    %v1602 = vld [vmem:[%s533] sm:$0xff]
    %1604 = vrot.lane.b32.xlu0 %v1601, 32
    %v1605 = vpop.permute.xlu0 %1604
    %v1606 = vsel %vm219, %v1605, 0
    %1608 = vmatprep.subr.mxu0 0.0
    %1609 = vmatpush1.msra.mxu0 %v1300
    %1610 = vmatprep.subr.mxu0 0.0
    %1611 = vmatpush1.msra.mxu0 %v1301
    %1612 = vmatprep.subr.mxu0 0.0
    %1613 = vmatpush1.msra.mxu0 %v1302
    %1614 = vmatprep.subr.mxu0 0.0
    %1615 = vmatpush1.msra.mxu0 %v1303
    %1616 = vmatprep.subr.mxu0 0.0
    %1617 = vmatpush1.msra.mxu0 0.0
    %1618 = vmatprep.subr.mxu0 0.0
    %1619 = vmatpush1.msra.mxu0 0.0
    %1620 = vmatprep.subr.mxu0 0.0
    %1621 = vmatpush1.msra.mxu0 0.0
    %1622 = vmatprep.subr.mxu0 0.0
    %1623 = vmatpush1.msra.mxu0 0.0
    %1624 = vmatprep.subr.mxu0 0.0
    %1625 = vmatpush1.msra.mxu0 0.0
    %1626 = vmatprep.subr.mxu0 0.0
    %1627 = vmatpush1.msra.mxu0 0.0
    %1628 = vmatprep.subr.mxu0 0.0
    %1629 = vmatpush1.msra.mxu0 0.0
    %1630 = vmatprep.subr.mxu0 0.0
    %1631 = vmatpush1.msra.mxu0 0.0
    %1632 = vmatprep.subr.mxu0 0.0
    %1633 = vmatpush1.msra.mxu0 0.0
    %1634 = vmatprep.subr.mxu0 0.0
    %1635 = vmatpush1.msra.mxu0 0.0
    %1636 = vmatprep.subr.mxu0 0.0
    %1637 = vmatpush1.msra.mxu0 0.0
    %1638 = vmatprep.subr.mxu0 0.0
    %1639 = vmatpush1.msra.mxu0 0.0
    %1640 = vmatprep.subr.mxu0 0.0
    %1641 = vmatpush1.msra.mxu0 0.0
    %1642 = vmatprep.subr.mxu0 0.0
    %1643 = vmatpush1.msra.mxu0 0.0
    %1644 = vmatprep.subr.mxu0 0.0
    %1645 = vmatpush1.msra.mxu0 0.0
    %1646 = vmatprep.subr.mxu0 0.0
    %1647 = vmatpush1.msra.mxu0 0.0
    %1648 = vmatprep.subr.mxu0 0.0
    %1649 = vmatpush1.msra.mxu0 0.0
    %1650 = vmatprep.subr.mxu0 0.0
    %1651 = vmatpush1.msra.mxu0 0.0
    %1652 = vmatprep.subr.mxu0 0.0
    %1653 = vmatpush1.msra.mxu0 0.0
    %1654 = vmatprep.subr.mxu0 0.0
    %1655 = vmatpush1.msra.mxu0 0.0
    %1656 = vmatprep.subr.mxu0 0.0
    %1657 = vmatpush1.msra.mxu0 0.0
    %1658 = vmatprep.subr.mxu0 0.0
    %1659 = vmatpush1.msra.mxu0 0.0
    %1660 = vmatprep.subr.mxu0 0.0
    %1661 = vmatpush1.msra.mxu0 0.0
    %1662 = vmatprep.subr.mxu0 0.0
    %1663 = vmatpush1.msra.mxu0 0.0
    %1664 = vmatprep.subr.mxu0 0.0
    %1665 = vmatpush1.msra.mxu0 0.0
    %1666 = vmatprep.subr.mxu0 0.0
    %1667 = vmatpush1.msra.mxu0 0.0
    %1668 = vmatprep.subr.mxu0 0.0
    %1669 = vmatpush1.msra.mxu0 0.0
    %1670 = vmatprep.subr.mxu0 0.0
    %1671 = vmatpush1.msra.mxu0 0.0
    %1672 = vmatprep.mubr.f32.mxu0 0.0
    %1673 = vmatmul.mubr.f32.gmra.mrb[0].mxu0 %v1606
    %v1674 = vpop.f32.mrb[0].mxu0
    %v1675 = vadd.f32 0.0, %v1674
    %v1676 = vpop.f32.mrb[0].mxu0
    %1677 = vdwg.mxu0
    %v1678 = vadd.f32 %v1602, %v1675
    %v1679 = vxor.u32 %v1678, 2147483648
    %v1680 = vmul.f32 %v1679, 1.442695
    %v1681 = vpow.pop %v1680
    %v1682 = vadd.f32 %v1681, 1.0
    %v1683 = vrcp.pop %v1682
    %v1684 = vmul.f32 1.0, %v1683
    %v1685 = vtanh.pop %v1678
    %v1686 = vmul.f32 %v1684, %v1595
    %1688 = vrot.lane.b32.xlu0 %v1685, 64
    %v1689 = vpop.permute.xlu0 %1688
    %v1691 = vmul.f32 %v1684, %v1689
    %1693 = vrot.lane.b32.xlu0 %v1691, 32
    %v1694 = vpop.permute.xlu0 %1693
    %v1696 = vadd.f32 %v1686, %v1694
    %v1697 = vtanh.pop %v1696
    %1699 = vrot.lane.b32.xlu0 %v1697, 64
    %v1700 = vpop.permute.xlu0 %1699
    %v1702 = vmul.f32 %v1684, %v1700
    %v1703 = vld [vmem:[%s638] sm:$0xff]
    %1705 = vrot.lane.b32.xlu0 %v1702, 32
    %v1706 = vpop.permute.xlu0 %1705
    %v1707 = vsel %vm219, %v1706, 0
    %1709 = vmatprep.subr.mxu0 0.0
    %1710 = vmatpush1.msra.mxu0 %v1300
    %1711 = vmatprep.subr.mxu0 0.0
    %1712 = vmatpush1.msra.mxu0 %v1301
    %1713 = vmatprep.subr.mxu0 0.0
    %1714 = vmatpush1.msra.mxu0 %v1302
    %1715 = vmatprep.subr.mxu0 0.0
    %1716 = vmatpush1.msra.mxu0 %v1303
    %1717 = vmatprep.subr.mxu0 0.0
    %1718 = vmatpush1.msra.mxu0 0.0
    %1719 = vmatprep.subr.mxu0 0.0
    %1720 = vmatpush1.msra.mxu0 0.0
    %1721 = vmatprep.subr.mxu0 0.0
    %1722 = vmatpush1.msra.mxu0 0.0
    %1723 = vmatprep.subr.mxu0 0.0
    %1724 = vmatpush1.msra.mxu0 0.0
    %1725 = vmatprep.subr.mxu0 0.0
    %1726 = vmatpush1.msra.mxu0 0.0
    %1727 = vmatprep.subr.mxu0 0.0
    %1728 = vmatpush1.msra.mxu0 0.0
    %1729 = vmatprep.subr.mxu0 0.0
    %1730 = vmatpush1.msra.mxu0 0.0
    %1731 = vmatprep.subr.mxu0 0.0
    %1732 = vmatpush1.msra.mxu0 0.0
    %1733 = vmatprep.subr.mxu0 0.0
    %1734 = vmatpush1.msra.mxu0 0.0
    %1735 = vmatprep.subr.mxu0 0.0
    %1736 = vmatpush1.msra.mxu0 0.0
    %1737 = vmatprep.subr.mxu0 0.0
    %1738 = vmatpush1.msra.mxu0 0.0
    %1739 = vmatprep.subr.mxu0 0.0
    %1740 = vmatpush1.msra.mxu0 0.0
    %1741 = vmatprep.subr.mxu0 0.0
    %1742 = vmatpush1.msra.mxu0 0.0
    %1743 = vmatprep.subr.mxu0 0.0
    %1744 = vmatpush1.msra.mxu0 0.0
    %1745 = vmatprep.subr.mxu0 0.0
    %1746 = vmatpush1.msra.mxu0 0.0
    %1747 = vmatprep.subr.mxu0 0.0
    %1748 = vmatpush1.msra.mxu0 0.0
    %1749 = vmatprep.subr.mxu0 0.0
    %1750 = vmatpush1.msra.mxu0 0.0
    %1751 = vmatprep.subr.mxu0 0.0
    %1752 = vmatpush1.msra.mxu0 0.0
    %1753 = vmatprep.subr.mxu0 0.0
    %1754 = vmatpush1.msra.mxu0 0.0
    %1755 = vmatprep.subr.mxu0 0.0
    %1756 = vmatpush1.msra.mxu0 0.0
    %1757 = vmatprep.subr.mxu0 0.0
    %1758 = vmatpush1.msra.mxu0 0.0
    %1759 = vmatprep.subr.mxu0 0.0
    %1760 = vmatpush1.msra.mxu0 0.0
    %1761 = vmatprep.subr.mxu0 0.0
    %1762 = vmatpush1.msra.mxu0 0.0
    %1763 = vmatprep.subr.mxu0 0.0
    %1764 = vmatpush1.msra.mxu0 0.0
    %1765 = vmatprep.subr.mxu0 0.0
    %1766 = vmatpush1.msra.mxu0 0.0
    %1767 = vmatprep.subr.mxu0 0.0
    %1768 = vmatpush1.msra.mxu0 0.0
    %1769 = vmatprep.subr.mxu0 0.0
    %1770 = vmatpush1.msra.mxu0 0.0
    %1771 = vmatprep.subr.mxu0 0.0
    %1772 = vmatpush1.msra.mxu0 0.0
    %1773 = vmatprep.mubr.f32.mxu0 0.0
    %1774 = vmatmul.mubr.f32.gmra.mrb[0].mxu0 %v1707
    %v1775 = vpop.f32.mrb[0].mxu0
    %v1776 = vadd.f32 0.0, %v1775
    %v1777 = vpop.f32.mrb[0].mxu0
    %1778 = vdwg.mxu0
    %v1779 = vadd.f32 %v1703, %v1776
    %v1780 = vxor.u32 %v1779, 2147483648
    %v1781 = vmul.f32 %v1780, 1.442695
    %v1782 = vpow.pop %v1781
    %v1783 = vadd.f32 %v1782, 1.0
    %v1784 = vrcp.pop %v1783
    %v1785 = vmul.f32 1.0, %v1784
    %v1786 = vtanh.pop %v1779
    %v1787 = vmul.f32 %v1785, %v1696
    %1789 = vrot.lane.b32.xlu0 %v1786, 64
    %v1790 = vpop.permute.xlu0 %1789
    %v1792 = vmul.f32 %v1785, %v1790
    %1794 = vrot.lane.b32.xlu0 %v1792, 32
    %v1795 = vpop.permute.xlu0 %1794
    %v1797 = vadd.f32 %v1787, %v1795
    %v1798 = vtanh.pop %v1797
    %1800 = vrot.lane.b32.xlu0 %v1798, 64
    %v1801 = vpop.permute.xlu0 %1800
    %v1803 = vmul.f32 %v1785, %v1801
    %v1804 = vld [vmem:[%s743] sm:$0xff]
    %1806 = vrot.lane.b32.xlu0 %v1803, 32
    %v1807 = vpop.permute.xlu0 %1806
    %v1808 = vsel %vm219, %v1807, 0
    %1810 = vmatprep.subr.mxu0 0.0
    %1811 = vmatpush1.msra.mxu0 %v1300
    %1812 = vmatprep.subr.mxu0 0.0
    %1813 = vmatpush1.msra.mxu0 %v1301
    %1814 = vmatprep.subr.mxu0 0.0
    %1815 = vmatpush1.msra.mxu0 %v1302
    %1816 = vmatprep.subr.mxu0 0.0
    %1817 = vmatpush1.msra.mxu0 %v1303
    %1818 = vmatprep.subr.mxu0 0.0
    %1819 = vmatpush1.msra.mxu0 0.0
    %1820 = vmatprep.subr.mxu0 0.0
    %1821 = vmatpush1.msra.mxu0 0.0
    %1822 = vmatprep.subr.mxu0 0.0
    %1823 = vmatpush1.msra.mxu0 0.0
    %1824 = vmatprep.subr.mxu0 0.0
    %1825 = vmatpush1.msra.mxu0 0.0
    %1826 = vmatprep.subr.mxu0 0.0
    %1827 = vmatpush1.msra.mxu0 0.0
    %1828 = vmatprep.subr.mxu0 0.0
    %1829 = vmatpush1.msra.mxu0 0.0
    %1830 = vmatprep.subr.mxu0 0.0
    %1831 = vmatpush1.msra.mxu0 0.0
    %1832 = vmatprep.subr.mxu0 0.0
    %1833 = vmatpush1.msra.mxu0 0.0
    %1834 = vmatprep.subr.mxu0 0.0
    %1835 = vmatpush1.msra.mxu0 0.0
    %1836 = vmatprep.subr.mxu0 0.0
    %1837 = vmatpush1.msra.mxu0 0.0
    %1838 = vmatprep.subr.mxu0 0.0
    %1839 = vmatpush1.msra.mxu0 0.0
    %1840 = vmatprep.subr.mxu0 0.0
    %1841 = vmatpush1.msra.mxu0 0.0
    %1842 = vmatprep.subr.mxu0 0.0
    %1843 = vmatpush1.msra.mxu0 0.0
    %1844 = vmatprep.subr.mxu0 0.0
    %1845 = vmatpush1.msra.mxu0 0.0
    %1846 = vmatprep.subr.mxu0 0.0
    %1847 = vmatpush1.msra.mxu0 0.0
    %1848 = vmatprep.subr.mxu0 0.0
    %1849 = vmatpush1.msra.mxu0 0.0
    %1850 = vmatprep.subr.mxu0 0.0
    %1851 = vmatpush1.msra.mxu0 0.0
    %1852 = vmatprep.subr.mxu0 0.0
    %1853 = vmatpush1.msra.mxu0 0.0
    %1854 = vmatprep.subr.mxu0 0.0
    %1855 = vmatpush1.msra.mxu0 0.0
    %1856 = vmatprep.subr.mxu0 0.0
    %1857 = vmatpush1.msra.mxu0 0.0
    %1858 = vmatprep.subr.mxu0 0.0
    %1859 = vmatpush1.msra.mxu0 0.0
    %1860 = vmatprep.subr.mxu0 0.0
    %1861 = vmatpush1.msra.mxu0 0.0
    %1862 = vmatprep.subr.mxu0 0.0
    %1863 = vmatpush1.msra.mxu0 0.0
    %1864 = vmatprep.subr.mxu0 0.0
    %1865 = vmatpush1.msra.mxu0 0.0
    %1866 = vmatprep.subr.mxu0 0.0
    %1867 = vmatpush1.msra.mxu0 0.0
    %1868 = vmatprep.subr.mxu0 0.0
    %1869 = vmatpush1.msra.mxu0 0.0
    %1870 = vmatprep.subr.mxu0 0.0
    %1871 = vmatpush1.msra.mxu0 0.0
    %1872 = vmatprep.subr.mxu0 0.0
    %1873 = vmatpush1.msra.mxu0 0.0
    %1874 = vmatprep.mubr.f32.mxu0 0.0
    %1875 = vmatmul.mubr.f32.gmra.mrb[0].mxu0 %v1808
    %v1876 = vpop.f32.mrb[0].mxu0
    %v1877 = vadd.f32 0.0, %v1876
    %v1878 = vpop.f32.mrb[0].mxu0
    %1879 = vdwg.mxu0
    %v1880 = vadd.f32 %v1804, %v1877
    %v1881 = vxor.u32 %v1880, 2147483648
    %v1882 = vmul.f32 %v1881, 1.442695
    %v1883 = vpow.pop %v1882
    %v1884 = vadd.f32 %v1883, 1.0
    %v1885 = vrcp.pop %v1884
    %v1886 = vmul.f32 1.0, %v1885
    %v1887 = vtanh.pop %v1880
    %v1888 = vmul.f32 %v1886, %v1797
    %1890 = vrot.lane.b32.xlu0 %v1887, 64
    %v1891 = vpop.permute.xlu0 %1890
    %v1893 = vmul.f32 %v1886, %v1891
    %1895 = vrot.lane.b32.xlu0 %v1893, 32
    %v1896 = vpop.permute.xlu0 %1895
    %v1898 = vadd.f32 %v1888, %v1896
    %v1899 = vtanh.pop %v1898
    %1901 = vrot.lane.b32.xlu0 %v1899, 64
    %v1902 = vpop.permute.xlu0 %1901
    %v1904 = vmul.f32 %v1886, %v1902
    %v1905 = vld [vmem:[%s848] sm:$0xff]
    %1907 = vrot.lane.b32.xlu0 %v1904, 32
    %v1908 = vpop.permute.xlu0 %1907
    %v1909 = vsel %vm219, %v1908, 0
    %1911 = vmatprep.subr.mxu0 0.0
    %1912 = vmatpush1.msra.mxu0 %v1300
    %1913 = vmatprep.subr.mxu0 0.0
    %1914 = vmatpush1.msra.mxu0 %v1301
    %1915 = vmatprep.subr.mxu0 0.0
    %1916 = vmatpush1.msra.mxu0 %v1302
    %1917 = vmatprep.subr.mxu0 0.0
    %1918 = vmatpush1.msra.mxu0 %v1303
    %1919 = vmatprep.subr.mxu0 0.0
    %1920 = vmatpush1.msra.mxu0 0.0
    %1921 = vmatprep.subr.mxu0 0.0
    %1922 = vmatpush1.msra.mxu0 0.0
    %1923 = vmatprep.subr.mxu0 0.0
    %1924 = vmatpush1.msra.mxu0 0.0
    %1925 = vmatprep.subr.mxu0 0.0
    %1926 = vmatpush1.msra.mxu0 0.0
    %1927 = vmatprep.subr.mxu0 0.0
    %1928 = vmatpush1.msra.mxu0 0.0
    %1929 = vmatprep.subr.mxu0 0.0
    %1930 = vmatpush1.msra.mxu0 0.0
    %1931 = vmatprep.subr.mxu0 0.0
    %1932 = vmatpush1.msra.mxu0 0.0
    %1933 = vmatprep.subr.mxu0 0.0
    %1934 = vmatpush1.msra.mxu0 0.0
    %1935 = vmatprep.subr.mxu0 0.0
    %1936 = vmatpush1.msra.mxu0 0.0
    %1937 = vmatprep.subr.mxu0 0.0
    %1938 = vmatpush1.msra.mxu0 0.0
    %1939 = vmatprep.subr.mxu0 0.0
    %1940 = vmatpush1.msra.mxu0 0.0
    %1941 = vmatprep.subr.mxu0 0.0
    %1942 = vmatpush1.msra.mxu0 0.0
    %1943 = vmatprep.subr.mxu0 0.0
    %1944 = vmatpush1.msra.mxu0 0.0
    %1945 = vmatprep.subr.mxu0 0.0
    %1946 = vmatpush1.msra.mxu0 0.0
    %1947 = vmatprep.subr.mxu0 0.0
    %1948 = vmatpush1.msra.mxu0 0.0
    %1949 = vmatprep.subr.mxu0 0.0
    %1950 = vmatpush1.msra.mxu0 0.0
    %1951 = vmatprep.subr.mxu0 0.0
    %1952 = vmatpush1.msra.mxu0 0.0
    %1953 = vmatprep.subr.mxu0 0.0
    %1954 = vmatpush1.msra.mxu0 0.0
    %1955 = vmatprep.subr.mxu0 0.0
    %1956 = vmatpush1.msra.mxu0 0.0
    %1957 = vmatprep.subr.mxu0 0.0
    %1958 = vmatpush1.msra.mxu0 0.0
    %1959 = vmatprep.subr.mxu0 0.0
    %1960 = vmatpush1.msra.mxu0 0.0
    %1961 = vmatprep.subr.mxu0 0.0
    %1962 = vmatpush1.msra.mxu0 0.0
    %1963 = vmatprep.subr.mxu0 0.0
    %1964 = vmatpush1.msra.mxu0 0.0
    %1965 = vmatprep.subr.mxu0 0.0
    %1966 = vmatpush1.msra.mxu0 0.0
    %1967 = vmatprep.subr.mxu0 0.0
    %1968 = vmatpush1.msra.mxu0 0.0
    %1969 = vmatprep.subr.mxu0 0.0
    %1970 = vmatpush1.msra.mxu0 0.0
    %1971 = vmatprep.subr.mxu0 0.0
    %1972 = vmatpush1.msra.mxu0 0.0
    %1973 = vmatprep.subr.mxu0 0.0
    %1974 = vmatpush1.msra.mxu0 0.0
    %1975 = vmatprep.mubr.f32.mxu0 0.0
    %1976 = vmatmul.mubr.f32.gmra.mrb[0].mxu0 %v1909
    %v1977 = vpop.f32.mrb[0].mxu0
    %v1978 = vadd.f32 0.0, %v1977
    %v1979 = vpop.f32.mrb[0].mxu0
    %1980 = vdwg.mxu0
    %v1981 = vadd.f32 %v1905, %v1978
    %v1982 = vxor.u32 %v1981, 2147483648
    %v1983 = vmul.f32 %v1982, 1.442695
    %v1984 = vpow.pop %v1983
    %v1985 = vadd.f32 %v1984, 1.0
    %v1986 = vrcp.pop %v1985
    %v1987 = vmul.f32 1.0, %v1986
    %v1988 = vtanh.pop %v1981
    %v1989 = vmul.f32 %v1987, %v1898
    %1991 = vrot.lane.b32.xlu0 %v1988, 64
    %v1992 = vpop.permute.xlu0 %1991
    %v1994 = vmul.f32 %v1987, %v1992
    %1996 = vrot.lane.b32.xlu0 %v1994, 32
    %v1997 = vpop.permute.xlu0 %1996
    %v1999 = vadd.f32 %v1989, %v1997
    %v2000 = vtanh.pop %v1999
    %2002 = vrot.lane.b32.xlu0 %v2000, 64
    %v2003 = vpop.permute.xlu0 %2002
    %v2005 = vmul.f32 %v1987, %v2003
    %v2006 = vld [vmem:[%s953] sm:$0xff]
    %2008 = vrot.lane.b32.xlu0 %v2005, 32
    %v2009 = vpop.permute.xlu0 %2008
    %v2010 = vsel %vm219, %v2009, 0
    %2012 = vmatprep.subr.mxu0 0.0
    %2013 = vmatpush1.msra.mxu0 %v1300
    %2014 = vmatprep.subr.mxu0 0.0
    %2015 = vmatpush1.msra.mxu0 %v1301
    %2016 = vmatprep.subr.mxu0 0.0
    %2017 = vmatpush1.msra.mxu0 %v1302
    %2018 = vmatprep.subr.mxu0 0.0
    %2019 = vmatpush1.msra.mxu0 %v1303
    %2020 = vmatprep.subr.mxu0 0.0
    %2021 = vmatpush1.msra.mxu0 0.0
    %2022 = vmatprep.subr.mxu0 0.0
    %2023 = vmatpush1.msra.mxu0 0.0
    %2024 = vmatprep.subr.mxu0 0.0
    %2025 = vmatpush1.msra.mxu0 0.0
    %2026 = vmatprep.subr.mxu0 0.0
    %2027 = vmatpush1.msra.mxu0 0.0
    %2028 = vmatprep.subr.mxu0 0.0
    %2029 = vmatpush1.msra.mxu0 0.0
    %2030 = vmatprep.subr.mxu0 0.0
    %2031 = vmatpush1.msra.mxu0 0.0
    %2032 = vmatprep.subr.mxu0 0.0
    %2033 = vmatpush1.msra.mxu0 0.0
    %2034 = vmatprep.subr.mxu0 0.0
    %2035 = vmatpush1.msra.mxu0 0.0
    %2036 = vmatprep.subr.mxu0 0.0
    %2037 = vmatpush1.msra.mxu0 0.0
    %2038 = vmatprep.subr.mxu0 0.0
    %2039 = vmatpush1.msra.mxu0 0.0
    %2040 = vmatprep.subr.mxu0 0.0
    %2041 = vmatpush1.msra.mxu0 0.0
    %2042 = vmatprep.subr.mxu0 0.0
    %2043 = vmatpush1.msra.mxu0 0.0
    %2044 = vmatprep.subr.mxu0 0.0
    %2045 = vmatpush1.msra.mxu0 0.0
    %2046 = vmatprep.subr.mxu0 0.0
    %2047 = vmatpush1.msra.mxu0 0.0
    %2048 = vmatprep.subr.mxu0 0.0
    %2049 = vmatpush1.msra.mxu0 0.0
    %2050 = vmatprep.subr.mxu0 0.0
    %2051 = vmatpush1.msra.mxu0 0.0
    %2052 = vmatprep.subr.mxu0 0.0
    %2053 = vmatpush1.msra.mxu0 0.0
    %2054 = vmatprep.subr.mxu0 0.0
    %2055 = vmatpush1.msra.mxu0 0.0
    %2056 = vmatprep.subr.mxu0 0.0
    %2057 = vmatpush1.msra.mxu0 0.0
    %2058 = vmatprep.subr.mxu0 0.0
    %2059 = vmatpush1.msra.mxu0 0.0
    %2060 = vmatprep.subr.mxu0 0.0
    %2061 = vmatpush1.msra.mxu0 0.0
    %2062 = vmatprep.subr.mxu0 0.0
    %2063 = vmatpush1.msra.mxu0 0.0
    %2064 = vmatprep.subr.mxu0 0.0
    %2065 = vmatpush1.msra.mxu0 0.0
    %2066 = vmatprep.subr.mxu0 0.0
    %2067 = vmatpush1.msra.mxu0 0.0
    %2068 = vmatprep.subr.mxu0 0.0
    %2069 = vmatpush1.msra.mxu0 0.0
    %2070 = vmatprep.subr.mxu0 0.0
    %2071 = vmatpush1.msra.mxu0 0.0
    %2072 = vmatprep.subr.mxu0 0.0
    %2073 = vmatpush1.msra.mxu0 0.0
    %2074 = vmatprep.subr.mxu0 0.0
    %2075 = vmatpush1.msra.mxu0 0.0
    %2076 = vmatprep.mubr.f32.mxu0 0.0
    %2077 = vmatmul.mubr.f32.gmra.mrb[0].mxu0 %v2010
    %v2078 = vpop.f32.mrb[0].mxu0
    %v2079 = vadd.f32 0.0, %v2078
    %v2080 = vpop.f32.mrb[0].mxu0
    %2081 = vdwg.mxu0
    %v2082 = vadd.f32 %v2006, %v2079
    %v2083 = vxor.u32 %v2082, 2147483648
    %v2084 = vmul.f32 %v2083, 1.442695
    %v2085 = vpow.pop %v2084
    %v2086 = vadd.f32 %v2085, 1.0
    %v2087 = vrcp.pop %v2086
    %v2088 = vmul.f32 1.0, %v2087
    %v2089 = vtanh.pop %v2082
    %v2090 = vmul.f32 %v2088, %v1999
    %2092 = vrot.lane.b32.xlu0 %v2089, 64
    %v2093 = vpop.permute.xlu0 %2092
    %v2095 = vmul.f32 %v2088, %v2093
    %2097 = vrot.lane.b32.xlu0 %v2095, 32
    %v2098 = vpop.permute.xlu0 %2097
    %v2100 = vadd.f32 %v2090, %v2098
    %v2101 = vtanh.pop %v2100
    %2103 = vrot.lane.b32.xlu0 %v2101, 64
    %v2104 = vpop.permute.xlu0 %2103
    %v2106 = vmul.f32 %v2088, %v2104
    %v2107 = vld [vmem:[%s5] sm:$0xff]
    %v2108 = vld [vmem:[%s5 + $0x8] sm:$0xff]
    %v2109 = vld [vmem:[%s5 + $0x10] sm:$0xff]
    %v2110 = vld [vmem:[%s5 + $0x18] sm:$0xff]
    %v2111 = vld [vmem:[%s6] sm:$0x1]
    %v2113 = vlaneseq
    %v2114 = vshrl.u32 %v2113, 7
    %v2115 = vsub.s32 0, %v2114
    %v2116 = vrot.slane %v2111, %v2115
    %2119 = vrot.lane.b32.xlu0 %v2106, 32
    %v2120 = vpop.permute.xlu0 %2119
    %v2121 = vsel %vm219, %v2120, 0
    %2123 = vmatprep.subr.mxu0 0.0
    %2124 = vmatpush1.msra.mxu0 %v2107
    %2125 = vmatprep.subr.mxu0 0.0
    %2126 = vmatpush1.msra.mxu0 %v2108
    %2127 = vmatprep.subr.mxu0 0.0
    %2128 = vmatpush1.msra.mxu0 %v2109
    %2129 = vmatprep.subr.mxu0 0.0
    %2130 = vmatpush1.msra.mxu0 %v2110
    %2131 = vmatprep.subr.mxu0 0.0
    %2132 = vmatpush1.msra.mxu0 0.0
    %2133 = vmatprep.subr.mxu0 0.0
    %2134 = vmatpush1.msra.mxu0 0.0
    %2135 = vmatprep.subr.mxu0 0.0
    %2136 = vmatpush1.msra.mxu0 0.0
    %2137 = vmatprep.subr.mxu0 0.0
    %2138 = vmatpush1.msra.mxu0 0.0
    %2139 = vmatprep.subr.mxu0 0.0
    %2140 = vmatpush1.msra.mxu0 0.0
    %2141 = vmatprep.subr.mxu0 0.0
    %2142 = vmatpush1.msra.mxu0 0.0
    %2143 = vmatprep.subr.mxu0 0.0
    %2144 = vmatpush1.msra.mxu0 0.0
    %2145 = vmatprep.subr.mxu0 0.0
    %2146 = vmatpush1.msra.mxu0 0.0
    %2147 = vmatprep.subr.mxu0 0.0
    %2148 = vmatpush1.msra.mxu0 0.0
    %2149 = vmatprep.subr.mxu0 0.0
    %2150 = vmatpush1.msra.mxu0 0.0
    %2151 = vmatprep.subr.mxu0 0.0
    %2152 = vmatpush1.msra.mxu0 0.0
    %2153 = vmatprep.subr.mxu0 0.0
    %2154 = vmatpush1.msra.mxu0 0.0
    %2155 = vmatprep.subr.mxu0 0.0
    %2156 = vmatpush1.msra.mxu0 0.0
    %2157 = vmatprep.subr.mxu0 0.0
    %2158 = vmatpush1.msra.mxu0 0.0
    %2159 = vmatprep.subr.mxu0 0.0
    %2160 = vmatpush1.msra.mxu0 0.0
    %2161 = vmatprep.subr.mxu0 0.0
    %2162 = vmatpush1.msra.mxu0 0.0
    %2163 = vmatprep.subr.mxu0 0.0
    %2164 = vmatpush1.msra.mxu0 0.0
    %2165 = vmatprep.subr.mxu0 0.0
    %2166 = vmatpush1.msra.mxu0 0.0
    %2167 = vmatprep.subr.mxu0 0.0
    %2168 = vmatpush1.msra.mxu0 0.0
    %2169 = vmatprep.subr.mxu0 0.0
    %2170 = vmatpush1.msra.mxu0 0.0
    %2171 = vmatprep.subr.mxu0 0.0
    %2172 = vmatpush1.msra.mxu0 0.0
    %2173 = vmatprep.subr.mxu0 0.0
    %2174 = vmatpush1.msra.mxu0 0.0
    %2175 = vmatprep.subr.mxu0 0.0
    %2176 = vmatpush1.msra.mxu0 0.0
    %2177 = vmatprep.subr.mxu0 0.0
    %2178 = vmatpush1.msra.mxu0 0.0
    %2179 = vmatprep.subr.mxu0 0.0
    %2180 = vmatpush1.msra.mxu0 0.0
    %2181 = vmatprep.subr.mxu0 0.0
    %2182 = vmatpush1.msra.mxu0 0.0
    %2183 = vmatprep.subr.mxu0 0.0
    %2184 = vmatpush1.msra.mxu0 0.0
    %2185 = vmatprep.subr.mxu0 0.0
    %2186 = vmatpush1.msra.mxu0 0.0
    %2187 = vmatprep.mubr.f32.mxu0 0.0
    %2188 = vmatmul.mubr.f32.gmra.mrb[0].mxu0 %v2121
    %v2189 = vpop.f32.mrb[0].mxu0
    %v2190 = vadd.f32 %v2116, %v2189
    %v2191 = vpop.f32.mrb[0].mxu0
    %2192 = vdwg.mxu0
    %s2193 = scalar_lea.vmem [#allocation9], 8
    %2194 = vst [vmem:[%s2193] sm:$0xff] %v2190
    // Predicated region
    $region38: #{tpu_custom_call.1} parent=1 // pred_check
      _
    $region39: #{tpu_custom_call.1} parent=1 // pred_check_branch
      %2196 = sbr.rel (0) target = $region41
    $region40: #{tpu_custom_call.1} parent=1 // pred_region
      %s2198 = ssub.s32 256, 256
      %2199 = vsyncadd [#allocation6], %s2198
      %s2200 = sshll.u32 [#allocation9], 4
      %s2201 = int_to_ptr.vmem [resolvable:$true] %s2200
      %2206 = dma.vmem_to_hbm [thread:$0]  %s2201, 256, %s7, [#allocation6], 128, 128, 8
    $region41: #{tpu_custom_call.1} parent=1 // pred_fallthru
      _
    // Predicated region
    $region42: #{tpu_custom_call.1} parent=1 // pred_check
      _
    $region43: #{tpu_custom_call.1} parent=1 // pred_check_branch
      %2208 = sbr.rel (0) target = $region45
    $region44: #{tpu_custom_call.1} parent=1 // pred_region
      %2209 = dma.done [#allocation6], 256
    $region45: #{tpu_custom_call.1} parent=1 // pred_fallthru
      _
    %2210 = vsyncpa [#allocation5], 1
    %2211 = vsyncpa [#allocation8], 1
    %2212 = vsyncpa [#allocation6], 1

</llo_original>
